<compile_context>
chip_gen: v7x
topology: tpu7x:2x2x1
jax: 0.10.0
libtpu: 0.0.40
codegen_flags: <defaults>
</compile_context>

<pallas_src>
import math
from functools import partial

import jax
import jax.numpy as jnp
from jax.experimental import pallas as pl
from jax.experimental.pallas import tpu as pltpu

BN_EPS = 1e-5
_NEG = -1e30

# ---- packed (16,128) bias / BN-row indices ----
_V_C_GCN2_B = 0
_V_C_L1B = 1
_V_C_L2B = 2
_V_D_G1B1 = 3
_V_D_G1B2 = 4
_V_D_BNB_S = 5
_V_D_BNB_T = 6
_V_D_G2B1 = 7
_V_D_G2B2 = 8
_V_D_BND_S = 9
_V_D_BND_T = 10
_V_D_L1B = 11
_V_D_L2B = 12
_V_F_B1 = 13
_V_F_B2 = 14
_V_F_B3 = 15

# ---- packed (9,128,128) weight-slab indices ----
_W_C_LIN1 = 0
_W_C_LIN2 = 1
_W_D_G1W2 = 2
_W_D_G2W1 = 3
_W_D_G2W2 = 4
_W_D_LIN1 = 5
_W_D_LIN2 = 6
_W_F_W2 = 7
_W_F_W3 = 8

# ---- packed (2,256,128) weight-slab indices ----
_W256_C_GCN2 = 0
_W256_F_W1 = 1


# ----------------------------------------------------------------------------
# in-kernel helpers (traced inside the Pallas kernel)
# ----------------------------------------------------------------------------
def _vrow(vec_ref, i):
    """Static sublane slice of the packed bias/BN slab -> (1, 128) row view."""
    return vec_ref[i:i + 1, :]


def _elu(x):
    # ELU(alpha=1): x if x>0 else exp(x)-1 (min() keeps exp's argument bounded).
    return jnp.where(x > 0.0, x, jnp.exp(jnp.minimum(x, 0.0)) - 1.0)


def _pool_max(h, nm_ref, num_graphs, batch_pad):
    """global_max_pool.  h: (N,128) f32; nm_ref: (N,B) additive mask (0 / -1e30).

    Statically-unrolled loop over graphs: one lane column + add + sublane max per
    graph -> no (B,N,128) broadcast materialized.  Padded batch rows are zeros."""
    rows = []
    for b in range(batch_pad):
        if b < num_graphs:
            col = nm_ref[:, b:b + 1]                                   # (N, 1)
            rows.append(jnp.max(h + col, axis=0, keepdims=True))       # (1, 128)
        else:
            rows.append(jnp.zeros((1, h.shape[1]), jnp.float32))
    return jnp.concatenate(rows, axis=0)                               # (B_pad, 128)


# ----------------------------------------------------------------------------
# fused Pallas kernel: cell branch + drug branch + fcn head
# ----------------------------------------------------------------------------
def _fused_kernel(
    a_c_ref, x_c_ref, nm_c_ref,        # cell:  adjacency (bf16), features (f32), mask^T (f32)
    a_d_ref, x_d_ref, nm_d_ref,        # drug:  adjacency (bf16), features (f32), mask^T (f32)
    c_w1_ref, c_b1_ref, d_w1_ref,      # padded first-layer weights (bf16) + the one 256-wide bias
    w128_ref, w256_ref, vec_ref,       # packed weight slabs (bf16) + packed bias/BN rows (f32)
    out_ref,
    *, num_graphs, batch_pad,
):
    f32, bf16 = jnp.float32, jnp.bfloat16

    # ================= cell branch =================
    # GCNConv(4,256)-ReLU-GCNConv(256,128)-max_pool-Lin(+BN)-ReLU-[Drop]-Lin-ReLU
    a = a_c_ref[...]
    # GCNConv 1, aggregate-first: (A @ X) @ W1 + b1  (tiny feature dim -> far fewer FLOPs)
    h = jnp.dot(a, x_c_ref[...].astype(bf16), preferred_element_type=f32)         # (Nc, 8)
    h = jnp.dot(h.astype(bf16), c_w1_ref[...], preferred_element_type=f32) + c_b1_ref[...]
    h = jnp.maximum(h, 0.0)
    # GCNConv 2, transform-first: A @ (H @ W2) + b2  (no ReLU before pooling)
    h = jnp.dot(h.astype(bf16), w256_ref[_W256_C_GCN2], preferred_element_type=f32)
    h = jnp.dot(a, h.astype(bf16), preferred_element_type=f32) + _vrow(vec_ref, _V_C_GCN2_B)
    pooled = _pool_max(h, nm_c_ref, num_graphs, batch_pad)                         # (B_pad, 128)
    z = jnp.dot(pooled.astype(bf16), w128_ref[_W_C_LIN1],
                preferred_element_type=f32) + _vrow(vec_ref, _V_C_L1B)
    z = jnp.maximum(z, 0.0)                         # Dropout = identity (eval)
    z = jnp.dot(z.astype(bf16), w128_ref[_W_C_LIN2],
                preferred_element_type=f32) + _vrow(vec_ref, _V_C_L2B)
    cell = jnp.maximum(z, 0.0)

    # ================= drug branch =================
    # GIN-ReLU-BN-GIN-ReLU-BN-max_pool-Lin(+BN)-ReLU-[Drop]-Lin-ReLU
    a = a_d_ref[...]
    x = x_d_ref[...]
    # GINConv 1: MLP((1+eps)*x + sum_j x_j), eps=0; MLP = Lin(+BN folded)-ReLU-Lin
    pre = x + jnp.dot(a, x.astype(bf16), preferred_element_type=f32)
    m = jnp.dot(pre.astype(bf16), d_w1_ref[...],
                preferred_element_type=f32) + _vrow(vec_ref, _V_D_G1B1)
    m = jnp.maximum(m, 0.0)
    h = jnp.dot(m.astype(bf16), w128_ref[_W_D_G1W2],
                preferred_element_type=f32) + _vrow(vec_ref, _V_D_G1B2)
    h = jnp.maximum(h, 0.0)                                            # outer ReLU
    h = h * _vrow(vec_ref, _V_D_BNB_S) + _vrow(vec_ref, _V_D_BNB_T)    # BN (eval scale/shift)
    # GINConv 2
    pre = h + jnp.dot(a, h.astype(bf16), preferred_element_type=f32)
    m = jnp.dot(pre.astype(bf16), w128_ref[_W_D_G2W1],
                preferred_element_type=f32) + _vrow(vec_ref, _V_D_G2B1)
    m = jnp.maximum(m, 0.0)
    h = jnp.dot(m.astype(bf16), w128_ref[_W_D_G2W2],
                preferred_element_type=f32) + _vrow(vec_ref, _V_D_G2B2)
    h = jnp.maximum(h, 0.0)
    h = h * _vrow(vec_ref, _V_D_BND_S) + _vrow(vec_ref, _V_D_BND_T)
    pooled = _pool_max(h, nm_d_ref, num_graphs, batch_pad)                         # (B_pad, 128)
    z = jnp.dot(pooled.astype(bf16), w128_ref[_W_D_LIN1],
                preferred_element_type=f32) + _vrow(vec_ref, _V_D_L1B)
    z = jnp.maximum(z, 0.0)
    z = jnp.dot(z.astype(bf16), w128_ref[_W_D_LIN2],
                preferred_element_type=f32) + _vrow(vec_ref, _V_D_L2B)
    drug = jnp.maximum(z, 0.0)

    # ================= fcn head =================
    # Linear(256,128)(+BN)-ELU-[Drop]-Linear(128,64)(+BN)-ELU-[Drop]-Linear(64,1)
    # Single K=256 matmul (fills 256-deep v6e/v7x MXU); 64-wide stage lane-padded to 128.
    cat = jnp.concatenate([cell, drug], axis=-1)                                   # (B_pad, 256)
    h = jnp.dot(cat.astype(bf16), w256_ref[_W256_F_W1],
                preferred_element_type=f32) + _vrow(vec_ref, _V_F_B1)
    h = _elu(h)
    h = jnp.dot(h.astype(bf16), w128_ref[_W_F_W2],
                preferred_element_type=f32) + _vrow(vec_ref, _V_F_B2)
    h = _elu(h)
    # f_w3 rows 64..127 are zero and its 128 columns are copies of the single output
    # column -> lane-dense unmasked store; every lane carries the prediction.
    out_ref[...] = jnp.dot(h.astype(bf16), w128_ref[_W_F_W3],
                           preferred_element_type=f32) + _vrow(vec_ref, _V_F_B3)


# ----------------------------------------------------------------------------
# JAX glue: dense graph operators, parameter init (kernel-ready), forward
# ----------------------------------------------------------------------------
def dense_adj(edge_index, num_nodes):
    """A[dst, src] += 1 per edge (edge multiplicity counts, as in PyG sum aggregation)."""
    src, dst = edge_index[0], edge_index[1]
    a = jnp.zeros((num_nodes, num_nodes), jnp.float32)
    return a.at[dst, src].add(1.0)


def gcn_norm_adj(edge_index, num_nodes):
    """Symmetrically-normalized adjacency with (remaining) self-loops (PyG GCNConv)."""
    a = dense_adj(edge_index, num_nodes)
    a = jnp.maximum(a, jnp.eye(num_nodes, dtype=jnp.float32))      # add remaining self loops
    deg = jnp.sum(a, axis=1)
    dinv = jax.lax.rsqrt(deg)
    return dinv[:, None] * a * dinv[None, :]


def _init(key, shape, scale=None):
    if scale is None:
        scale = 1.0 / math.sqrt(shape[0])
    return scale * jax.random.normal(key, shape, dtype=jnp.float32)


def _bn_eval_scale_shift(dim):
    # Fresh PyTorch BatchNorm1d running stats / affine params, eval mode.
    gamma = jnp.ones((dim,), jnp.float32)
    beta = jnp.zeros((dim,), jnp.float32)
    mean = jnp.zeros((dim,), jnp.float32)
    var = jnp.ones((dim,), jnp.float32)
    s = gamma / jnp.sqrt(var + BN_EPS)
    t = beta - mean * s
    return s, t


def _fold_bn_into_linear(w, b, dim):
    s, t = _bn_eval_scale_shift(dim)
    return w * s[None, :], b * s + t


def init_params(key):
    """Returns kernel-ready packed/padded/bf16 parameters (all prep hoisted here)."""
    ks = iter(jax.random.split(key, 64))
    f32, bf16 = jnp.float32, jnp.bfloat16

    # ---- cell branch: GCNConv(4,256), GCNConv(256,128), Lin128+BN, Lin128 ----
    c_gcn1_w = _init(next(ks), (4, 256))
    c_gcn1_b = _init(next(ks), (256,), 0.02)
    c_gcn2_w = _init(next(ks), (256, 128))
    c_gcn2_b = _init(next(ks), (128,), 0.02)
    c_lin1_w, c_lin1_b = _fold_bn_into_linear(
        _init(next(ks), (128, 128)), _init(next(ks), (128,), 0.02), 128)
    c_lin2_w = _init(next(ks), (128, 128))
    c_lin2_b = _init(next(ks), (128,), 0.02)

    # ---- drug branch: GIN(9->128 MLP), BN, GIN(128->128 MLP), BN, Lin+BN, Lin ----
    d_g1_w1, d_g1_b1 = _fold_bn_into_linear(
        _init(next(ks), (9, 128)), _init(next(ks), (128,), 0.02), 128)
    d_g1_w2 = _init(next(ks), (128, 128))
    d_g1_b2 = _init(next(ks), (128,), 0.02)
    d_bnb_s, d_bnb_t = _bn_eval_scale_shift(128)
    d_g2_w1, d_g2_b1 = _fold_bn_into_linear(
        _init(next(ks), (128, 128)), _init(next(ks), (128,), 0.02), 128)
    d_g2_w2 = _init(next(ks), (128, 128))
    d_g2_b2 = _init(next(ks), (128,), 0.02)
    d_bnd_s, d_bnd_t = _bn_eval_scale_shift(128)
    d_lin1_w, d_lin1_b = _fold_bn_into_linear(
        _init(next(ks), (128, 128)), _init(next(ks), (128,), 0.02), 128)
    d_lin2_w = _init(next(ks), (128, 128))
    d_lin2_b = _init(next(ks), (128,), 0.02)

    # ---- fcn head: Linear(256,128)+BN, Linear(128,64)+BN, Linear(64,1) ----
    f_w1, f_b1 = _fold_bn_into_linear(
        _init(next(ks), (256, 128)), _init(next(ks), (128,), 0.02), 128)   # rows [cell;drug]
    f_w2, f_b2 = _fold_bn_into_linear(
        _init(next(ks), (128, 64)), _init(next(ks), (64,), 0.02), 64)
    f_w3 = _init(next(ks), (64, 1))
    f_b3 = _init(next(ks), (1,), 0.02)

    # ---- pack into kernel-ready slabs ----
    f_w2_p = jnp.pad(f_w2, ((0, 0), (0, 64)))                        # lane-pad 64 -> 128
    f_b2_p = jnp.pad(f_b2, (0, 64))
    f_w3_p = jnp.pad(jnp.tile(f_w3, (1, 128)), ((0, 64), (0, 0)))    # (64,1)->(128,128)
    f_b3_row = jnp.full((128,), f_b3[0], f32)

    w128 = jnp.stack(
        [c_lin1_w, c_lin2_w, d_g1_w2, d_g2_w1, d_g2_w2, d_lin1_w, d_lin2_w, f_w2_p, f_w3_p],
        axis=0).astype(bf16)                                         # (9, 128, 128)
    w256 = jnp.stack([c_gcn2_w, f_w1], axis=0).astype(bf16)          # (2, 256, 128)
    vec = jnp.stack(
        [c_gcn2_b, c_lin1_b, c_lin2_b,
         d_g1_b1, d_g1_b2, d_bnb_s, d_bnb_t,
         d_g2_b1, d_g2_b2, d_bnd_s, d_bnd_t,
         d_lin1_b, d_lin2_b,
         f_b1, f_b2_p, f_b3_row],
        axis=0).astype(f32)                                          # (16, 128)

    return {
        "c_gcn1_w": jnp.pad(c_gcn1_w, ((0, 4), (0, 0))).astype(bf16),   # (4,256) -> (8,256)
        "c_gcn1_b": c_gcn1_b.reshape(1, 256).astype(f32),
        "d_g1_w1": jnp.pad(d_g1_w1, ((0, 7), (0, 0))).astype(bf16),     # (9,128) -> (16,128)
        "w128": w128,
        "w256": w256,
        "vec": vec,
    }


def graph_graph_forward(p, cell_x, cell_edge_index, cell_batch,
                        drug_x, drug_edge_index, drug_batch, num_graphs):
    n_cell = cell_x.shape[0]
    n_drug = drug_x.shape[0]
    batch_pad = max(8, ((num_graphs + 7) // 8) * 8)

    # Per-call graph data prep (adjacencies in bf16, additive pool masks transposed).
    a_cell = gcn_norm_adj(cell_edge_index, n_cell).astype(jnp.bfloat16)
    a_drug = dense_adj(drug_edge_index, n_drug).astype(jnp.bfloat16)
    graph_ids = jnp.arange(num_graphs, dtype=cell_batch.dtype)
    nm_c = jnp.where(cell_batch[:, None] == graph_ids[None, :], 0.0, _NEG).astype(jnp.float32)
    nm_d = jnp.where(drug_batch[:, None] == graph_ids[None, :], 0.0, _NEG).astype(jnp.float32)
    cell_x_p = jnp.pad(cell_x, ((0, 0), (0, 8 - cell_x.shape[1]))).astype(jnp.float32)
    drug_x_p = jnp.pad(drug_x, ((0, 0), (0, 16 - drug_x.shape[1]))).astype(jnp.float32)

    inputs = [
        a_cell, cell_x_p, nm_c,
        a_drug, drug_x_p, nm_d,
        p["c_gcn1_w"], p["c_gcn1_b"], p["d_g1_w1"],
        p["w128"], p["w256"], p["vec"],
    ]

    # Single fused, gridless pallas_call (everything resident in VMEM; at larger node
    # counts add a row-tiled grid over A / X with the reduction axis "arbitrary").
    kernel = partial(_fused_kernel, num_graphs=num_graphs, batch_pad=batch_pad)
    out = pl.pallas_call(
        kernel,
        out_shape=jax.ShapeDtypeStruct((batch_pad, 128), jnp.float32),
        in_specs=[pl.BlockSpec(memory_space=pltpu.MemorySpace.VMEM) for _ in inputs],
        out_specs=pl.BlockSpec(memory_space=pltpu.MemorySpace.VMEM),
        compiler_params=pltpu.CompilerParams(
            # Above v5e's 16 MiB default scoped limit, with headroom inside v7x's 64 MiB.
            vmem_limit_bytes=32 * 1024 * 1024),
    )(*inputs)

    # y_pred.reshape(B): every lane of a row carries the same prediction -> read lane 0.
    return out[:num_graphs, 0]


# ----------------------------------------------------------------------------
# example inputs
# ----------------------------------------------------------------------------
def ring_edges(num_graphs, nodes_per_graph):
    edges = []
    for g in range(num_graphs):
        off = g * nodes_per_graph
        for i in range(nodes_per_graph):
            a = off + i
            b = off + (i + 1) % nodes_per_graph
            edges.append((a, b))
            edges.append((b, a))
    return jnp.asarray(edges, dtype=jnp.int32).T   # (2, E)


if __name__ == "__main__":
    key = jax.random.PRNGKey(0)
    k_param, k_cell, k_drug = jax.random.split(key, 3)

    num_graphs = 2
    cell_nodes_per_graph = 16   # keep node counts multiples of 8
    drug_nodes_per_graph = 12

    n_cell = num_graphs * cell_nodes_per_graph   # 32
    n_drug = num_graphs * drug_nodes_per_graph   # 24

    cell_x = jax.random.normal(k_cell, (n_cell, 4), dtype=jnp.float32)
    drug_x = jax.random.normal(k_drug, (n_drug, 9), dtype=jnp.float32)
    cell_edge_index = ring_edges(num_graphs, cell_nodes_per_graph)
    drug_edge_index = ring_edges(num_graphs, drug_nodes_per_graph)
    cell_batch = jnp.repeat(jnp.arange(num_graphs, dtype=jnp.int32), cell_nodes_per_graph)
    drug_batch = jnp.repeat(jnp.arange(num_graphs, dtype=jnp.int32), drug_nodes_per_graph)

    params = init_params(k_param)

    fwd = jax.jit(partial(graph_graph_forward, num_graphs=num_graphs))
    y_pred = fwd(params, cell_x, cell_edge_index, cell_batch,
                 drug_x, drug_edge_index, drug_batch)
    y_pred = jax.block_until_ready(y_pred)

    assert y_pred.shape == (num_graphs,)
    assert bool(jnp.all(jnp.isfinite(y_pred)))
    print("KERNEL_OK")
</pallas_src>

<mosaic_0001>
module attributes {stable_mosaic.version = 11 : i64} {
  func.func private @main(%arg0: i32) attributes {dimension_semantics = [#tpu.dimension_semantics<core_parallel>], iteration_bounds = array<i64: 2>, tpu.core_type = #tpu.core_type<sc_scalar_subcore>, window_params = []} {
    return
  }
}

module attributes {stable_mosaic.version = 11 : i64} {
  func.func private @main(%arg0: i32) attributes {dimension_semantics = [#tpu.dimension_semantics<core_parallel>], iteration_bounds = array<i64: 2>, tpu.core_type = #tpu.core_type<sc_scalar_subcore>, window_params = []} {
    return
  }
}

module attributes {stable_mosaic.version = 11 : i64} {
  func.func @_fused_kernel(%arg0: memref<32x32xbf16, #tpu.memory_space<vmem>>, %arg1: memref<32x8xf32, #tpu.memory_space<vmem>>, %arg2: memref<32x2xf32, #tpu.memory_space<vmem>>, %arg3: memref<24x24xbf16, #tpu.memory_space<vmem>>, %arg4: memref<24x16xf32, #tpu.memory_space<vmem>>, %arg5: memref<24x2xf32, #tpu.memory_space<vmem>>, %arg6: memref<8x256xbf16, #tpu.memory_space<vmem>>, %arg7: memref<1x256xf32, #tpu.memory_space<vmem>>, %arg8: memref<16x128xbf16, #tpu.memory_space<vmem>>, %arg9: memref<9x128x128xbf16, #tpu.memory_space<vmem>>, %arg10: memref<2x256x128xbf16, #tpu.memory_space<vmem>>, %arg11: memref<16x128xf32, #tpu.memory_space<vmem>>, %arg12: memref<8x128xf32, #tpu.memory_space<vmem>>) attributes {dimension_semantics = [], scalar_prefetch = 0 : i64, scratch_operands = 0 : i64, tpu.core_type = #tpu.core_type<tc>} {
    %c0 = arith.constant 0 : index
    %c0_0 = arith.constant 0 : index
    %0 = vector.load %arg0[%c0, %c0_0] : memref<32x32xbf16, #tpu.memory_space<vmem>>, vector<32x32xbf16>
    %c0_1 = arith.constant 0 : index
    %c0_2 = arith.constant 0 : index
    %1 = vector.load %arg1[%c0_1, %c0_2] : memref<32x8xf32, #tpu.memory_space<vmem>>, vector<32x8xf32>
    %2 = arith.truncf %1 : vector<32x8xf32> to vector<32x8xbf16>
    %cst = arith.constant dense<0.000000e+00> : vector<32x8xf32>
    %3 = tpu.matmul %0, %2, %cst {dimension_numbers = #tpu.dot_dimension_numbers<[1], [0], [0], [1], [0, 0, 1, 1], [], []>} : vector<32x32xbf16>, vector<32x8xbf16>, vector<32x8xf32> -> vector<32x8xf32>
    %4 = arith.truncf %3 : vector<32x8xf32> to vector<32x8xbf16>
    %c0_3 = arith.constant 0 : index
    %c0_4 = arith.constant 0 : index
    %5 = vector.load %arg6[%c0_3, %c0_4] : memref<8x256xbf16, #tpu.memory_space<vmem>>, vector<8x256xbf16>
    %cst_5 = arith.constant dense<0.000000e+00> : vector<32x256xf32>
    %6 = tpu.matmul %4, %5, %cst_5 {dimension_numbers = #tpu.dot_dimension_numbers<[1], [0], [0], [1], [0, 0, 1, 1], [], []>} : vector<32x8xbf16>, vector<8x256xbf16>, vector<32x256xf32> -> vector<32x256xf32>
    %c0_6 = arith.constant 0 : index
    %c0_7 = arith.constant 0 : index
    %7 = vector.load %arg7[%c0_6, %c0_7] : memref<1x256xf32, #tpu.memory_space<vmem>>, vector<1x256xf32>
    %8 = vector.broadcast %7 : vector<1x256xf32> to vector<32x256xf32>
    %9 = arith.addf %6, %8 : vector<32x256xf32>
    %cst_8 = arith.constant 0.000000e+00 : f32
    %10 = vector.broadcast %cst_8 : f32 to vector<32x256xf32>
    %11 = arith.maximumf %9, %10 : vector<32x256xf32>
    %12 = arith.truncf %11 : vector<32x256xf32> to vector<32x256xbf16>
    %c0_9 = arith.constant 0 : index
    %c0_10 = arith.constant 0 : index
    %c0_11 = arith.constant 0 : index
    %13 = vector.load %arg10[%c0_9, %c0_10, %c0_11] : memref<2x256x128xbf16, #tpu.memory_space<vmem>>, vector<1x256x128xbf16>
    %14 = vector.shape_cast %13 : vector<1x256x128xbf16> to vector<256x128xbf16>
    %cst_12 = arith.constant dense<0.000000e+00> : vector<32x128xf32>
    %15 = tpu.matmul %12, %14, %cst_12 {dimension_numbers = #tpu.dot_dimension_numbers<[1], [0], [0], [1], [0, 0, 1, 1], [], []>} : vector<32x256xbf16>, vector<256x128xbf16>, vector<32x128xf32> -> vector<32x128xf32>
    %16 = arith.truncf %15 : vector<32x128xf32> to vector<32x128xbf16>
    %cst_13 = arith.constant dense<0.000000e+00> : vector<32x128xf32>
    %17 = tpu.matmul %0, %16, %cst_13 {dimension_numbers = #tpu.dot_dimension_numbers<[1], [0], [0], [1], [0, 0, 1, 1], [], []>} : vector<32x32xbf16>, vector<32x128xbf16>, vector<32x128xf32> -> vector<32x128xf32>
    %c0_14 = arith.constant 0 : index
    %c0_15 = arith.constant 0 : index
    %18 = vector.load %arg11[%c0_14, %c0_15] : memref<16x128xf32, #tpu.memory_space<vmem>>, vector<1x128xf32>
    %19 = vector.broadcast %18 : vector<1x128xf32> to vector<32x128xf32>
    %20 = arith.addf %17, %19 : vector<32x128xf32>
    %c0_16 = arith.constant 0 : index
    %c0_17 = arith.constant 0 : index
    %21 = vector.load %arg2[%c0_16, %c0_17] : memref<32x2xf32, #tpu.memory_space<vmem>>, vector<32x1xf32>
    %22 = vector.broadcast %21 : vector<32x1xf32> to vector<32x128xf32>
    %23 = arith.addf %20, %22 : vector<32x128xf32>
    %cst_18 = arith.constant dense<0xFF800000> : vector<128xf32>
    %24 = vector.multi_reduction <maximumf>, %23, %cst_18 [0] : vector<32x128xf32> to vector<128xf32>
    %25 = vector.shape_cast %24 : vector<128xf32> to vector<1x128xf32>
    %c0_19 = arith.constant 0 : index
    %c1 = arith.constant 1 : index
    %26 = vector.load %arg2[%c0_19, %c1] : memref<32x2xf32, #tpu.memory_space<vmem>>, vector<32x1xf32>
    %27 = vector.broadcast %26 : vector<32x1xf32> to vector<32x128xf32>
    %28 = arith.addf %20, %27 : vector<32x128xf32>
    %cst_20 = arith.constant dense<0xFF800000> : vector<128xf32>
    %29 = vector.multi_reduction <maximumf>, %28, %cst_20 [0] : vector<32x128xf32> to vector<128xf32>
    %30 = vector.shape_cast %29 : vector<128xf32> to vector<1x128xf32>
    %cst_21 = arith.constant 0.000000e+00 : f32
    %31 = vector.broadcast %cst_21 : f32 to vector<1x128xf32>
    %cst_22 = arith.constant 0.000000e+00 : f32
    %32 = vector.broadcast %cst_22 : f32 to vector<1x128xf32>
    %cst_23 = arith.constant 0.000000e+00 : f32
    %33 = vector.broadcast %cst_23 : f32 to vector<1x128xf32>
    %cst_24 = arith.constant 0.000000e+00 : f32
    %34 = vector.broadcast %cst_24 : f32 to vector<1x128xf32>
    %cst_25 = arith.constant 0.000000e+00 : f32
    %35 = vector.broadcast %cst_25 : f32 to vector<1x128xf32>
    %cst_26 = arith.constant 0.000000e+00 : f32
    %36 = vector.broadcast %cst_26 : f32 to vector<1x128xf32>
    %37 = tpu.concatenate %25, %30, %31, %32, %33, %34, %35, %36 in 0 : vector<1x128xf32>, vector<1x128xf32>, vector<1x128xf32>, vector<1x128xf32>, vector<1x128xf32>, vector<1x128xf32>, vector<1x128xf32>, vector<1x128xf32> -> vector<8x128xf32>
    %38 = arith.truncf %37 : vector<8x128xf32> to vector<8x128xbf16>
    %c0_27 = arith.constant 0 : index
    %c0_28 = arith.constant 0 : index
    %c0_29 = arith.constant 0 : index
    %39 = vector.load %arg9[%c0_27, %c0_28, %c0_29] : memref<9x128x128xbf16, #tpu.memory_space<vmem>>, vector<1x128x128xbf16>
    %40 = vector.shape_cast %39 : vector<1x128x128xbf16> to vector<128x128xbf16>
    %cst_30 = arith.constant dense<0.000000e+00> : vector<8x128xf32>
    %41 = tpu.matmul %38, %40, %cst_30 {dimension_numbers = #tpu.dot_dimension_numbers<[1], [0], [0], [1], [0, 0, 1, 1], [], []>} : vector<8x128xbf16>, vector<128x128xbf16>, vector<8x128xf32> -> vector<8x128xf32>
    %c1_31 = arith.constant 1 : index
    %c0_32 = arith.constant 0 : index
    %42 = vector.load %arg11[%c1_31, %c0_32] : memref<16x128xf32, #tpu.memory_space<vmem>>, vector<1x128xf32>
    %43 = vector.broadcast %42 : vector<1x128xf32> to vector<8x128xf32>
    %44 = arith.addf %41, %43 : vector<8x128xf32>
    %cst_33 = arith.constant 0.000000e+00 : f32
    %45 = vector.broadcast %cst_33 : f32 to vector<8x128xf32>
    %46 = arith.maximumf %44, %45 : vector<8x128xf32>
    %47 = arith.truncf %46 : vector<8x128xf32> to vector<8x128xbf16>
    %c1_34 = arith.constant 1 : index
    %c0_35 = arith.constant 0 : index
    %c0_36 = arith.constant 0 : index
    %48 = vector.load %arg9[%c1_34, %c0_35, %c0_36] : memref<9x128x128xbf16, #tpu.memory_space<vmem>>, vector<1x128x128xbf16>
    %49 = vector.shape_cast %48 : vector<1x128x128xbf16> to vector<128x128xbf16>
    %cst_37 = arith.constant dense<0.000000e+00> : vector<8x128xf32>
    %50 = tpu.matmul %47, %49, %cst_37 {dimension_numbers = #tpu.dot_dimension_numbers<[1], [0], [0], [1], [0, 0, 1, 1], [], []>} : vector<8x128xbf16>, vector<128x128xbf16>, vector<8x128xf32> -> vector<8x128xf32>
    %c2 = arith.constant 2 : index
    %c0_38 = arith.constant 0 : index
    %51 = vector.load %arg11[%c2, %c0_38] : memref<16x128xf32, #tpu.memory_space<vmem>>, vector<1x128xf32>
    %52 = vector.broadcast %51 : vector<1x128xf32> to vector<8x128xf32>
    %53 = arith.addf %50, %52 : vector<8x128xf32>
    %cst_39 = arith.constant 0.000000e+00 : f32
    %54 = vector.broadcast %cst_39 : f32 to vector<8x128xf32>
    %55 = arith.maximumf %53, %54 : vector<8x128xf32>
    %c0_40 = arith.constant 0 : index
    %c0_41 = arith.constant 0 : index
    %56 = vector.load %arg3[%c0_40, %c0_41] : memref<24x24xbf16, #tpu.memory_space<vmem>>, vector<24x24xbf16>
    %c0_42 = arith.constant 0 : index
    %c0_43 = arith.constant 0 : index
    %57 = vector.load %arg4[%c0_42, %c0_43] : memref<24x16xf32, #tpu.memory_space<vmem>>, vector<24x16xf32>
    %58 = arith.truncf %57 : vector<24x16xf32> to vector<24x16xbf16>
    %cst_44 = arith.constant dense<0.000000e+00> : vector<24x16xf32>
    %59 = tpu.matmul %56, %58, %cst_44 {dimension_numbers = #tpu.dot_dimension_numbers<[1], [0], [0], [1], [0, 0, 1, 1], [], []>} : vector<24x24xbf16>, vector<24x16xbf16>, vector<24x16xf32> -> vector<24x16xf32>
    %60 = arith.addf %57, %59 : vector<24x16xf32>
    %61 = arith.truncf %60 : vector<24x16xf32> to vector<24x16xbf16>
    %c0_45 = arith.constant 0 : index
    %c0_46 = arith.constant 0 : index
    %62 = vector.load %arg8[%c0_45, %c0_46] : memref<16x128xbf16, #tpu.memory_space<vmem>>, vector<16x128xbf16>
    %cst_47 = arith.constant dense<0.000000e+00> : vector<24x128xf32>
    %63 = tpu.matmul %61, %62, %cst_47 {dimension_numbers = #tpu.dot_dimension_numbers<[1], [0], [0], [1], [0, 0, 1, 1], [], []>} : vector<24x16xbf16>, vector<16x128xbf16>, vector<24x128xf32> -> vector<24x128xf32>
    %c3 = arith.constant 3 : index
    %c0_48 = arith.constant 0 : index
    %64 = vector.load %arg11[%c3, %c0_48] : memref<16x128xf32, #tpu.memory_space<vmem>>, vector<1x128xf32>
    %65 = vector.broadcast %64 : vector<1x128xf32> to vector<24x128xf32>
    %66 = arith.addf %63, %65 : vector<24x128xf32>
    %cst_49 = arith.constant 0.000000e+00 : f32
    %67 = vector.broadcast %cst_49 : f32 to vector<24x128xf32>
    %68 = arith.maximumf %66, %67 : vector<24x128xf32>
    %69 = arith.truncf %68 : vector<24x128xf32> to vector<24x128xbf16>
    %c2_50 = arith.constant 2 : index
    %c0_51 = arith.constant 0 : index
    %c0_52 = arith.constant 0 : index
    %70 = vector.load %arg9[%c2_50, %c0_51, %c0_52] : memref<9x128x128xbf16, #tpu.memory_space<vmem>>, vector<1x128x128xbf16>
    %71 = vector.shape_cast %70 : vector<1x128x128xbf16> to vector<128x128xbf16>
    %cst_53 = arith.constant dense<0.000000e+00> : vector<24x128xf32>
    %72 = tpu.matmul %69, %71, %cst_53 {dimension_numbers = #tpu.dot_dimension_numbers<[1], [0], [0], [1], [0, 0, 1, 1], [], []>} : vector<24x128xbf16>, vector<128x128xbf16>, vector<24x128xf32> -> vector<24x128xf32>
    %c4 = arith.constant 4 : index
    %c0_54 = arith.constant 0 : index
    %73 = vector.load %arg11[%c4, %c0_54] : memref<16x128xf32, #tpu.memory_space<vmem>>, vector<1x128xf32>
    %74 = vector.broadcast %73 : vector<1x128xf32> to vector<24x128xf32>
    %75 = arith.addf %72, %74 : vector<24x128xf32>
    %cst_55 = arith.constant 0.000000e+00 : f32
    %76 = vector.broadcast %cst_55 : f32 to vector<24x128xf32>
    %77 = arith.maximumf %75, %76 : vector<24x128xf32>
    %c5 = arith.constant 5 : index
    %c0_56 = arith.constant 0 : index
    %78 = vector.load %arg11[%c5, %c0_56] : memref<16x128xf32, #tpu.memory_space<vmem>>, vector<1x128xf32>
    %79 = vector.broadcast %78 : vector<1x128xf32> to vector<24x128xf32>
    %80 = arith.mulf %77, %79 : vector<24x128xf32>
    %c6 = arith.constant 6 : index
    %c0_57 = arith.constant 0 : index
    %81 = vector.load %arg11[%c6, %c0_57] : memref<16x128xf32, #tpu.memory_space<vmem>>, vector<1x128xf32>
    %82 = vector.broadcast %81 : vector<1x128xf32> to vector<24x128xf32>
    %83 = arith.addf %80, %82 : vector<24x128xf32>
    %84 = arith.truncf %83 : vector<24x128xf32> to vector<24x128xbf16>
    %cst_58 = arith.constant dense<0.000000e+00> : vector<24x128xf32>
    %85 = tpu.matmul %56, %84, %cst_58 {dimension_numbers = #tpu.dot_dimension_numbers<[1], [0], [0], [1], [0, 0, 1, 1], [], []>} : vector<24x24xbf16>, vector<24x128xbf16>, vector<24x128xf32> -> vector<24x128xf32>
    %86 = arith.addf %83, %85 : vector<24x128xf32>
    %87 = arith.truncf %86 : vector<24x128xf32> to vector<24x128xbf16>
    %c3_59 = arith.constant 3 : index
    %c0_60 = arith.constant 0 : index
    %c0_61 = arith.constant 0 : index
    %88 = vector.load %arg9[%c3_59, %c0_60, %c0_61] : memref<9x128x128xbf16, #tpu.memory_space<vmem>>, vector<1x128x128xbf16>
    %89 = vector.shape_cast %88 : vector<1x128x128xbf16> to vector<128x128xbf16>
    %cst_62 = arith.constant dense<0.000000e+00> : vector<24x128xf32>
    %90 = tpu.matmul %87, %89, %cst_62 {dimension_numbers = #tpu.dot_dimension_numbers<[1], [0], [0], [1], [0, 0, 1, 1], [], []>} : vector<24x128xbf16>, vector<128x128xbf16>, vector<24x128xf32> -> vector<24x128xf32>
    %c7 = arith.constant 7 : index
    %c0_63 = arith.constant 0 : index
    %91 = vector.load %arg11[%c7, %c0_63] : memref<16x128xf32, #tpu.memory_space<vmem>>, vector<1x128xf32>
    %92 = vector.broadcast %91 : vector<1x128xf32> to vector<24x128xf32>
    %93 = arith.addf %90, %92 : vector<24x128xf32>
    %cst_64 = arith.constant 0.000000e+00 : f32
    %94 = vector.broadcast %cst_64 : f32 to vector<24x128xf32>
    %95 = arith.maximumf %93, %94 : vector<24x128xf32>
    %96 = arith.truncf %95 : vector<24x128xf32> to vector<24x128xbf16>
    %c4_65 = arith.constant 4 : index
    %c0_66 = arith.constant 0 : index
    %c0_67 = arith.constant 0 : index
    %97 = vector.load %arg9[%c4_65, %c0_66, %c0_67] : memref<9x128x128xbf16, #tpu.memory_space<vmem>>, vector<1x128x128xbf16>
    %98 = vector.shape_cast %97 : vector<1x128x128xbf16> to vector<128x128xbf16>
    %cst_68 = arith.constant dense<0.000000e+00> : vector<24x128xf32>
    %99 = tpu.matmul %96, %98, %cst_68 {dimension_numbers = #tpu.dot_dimension_numbers<[1], [0], [0], [1], [0, 0, 1, 1], [], []>} : vector<24x128xbf16>, vector<128x128xbf16>, vector<24x128xf32> -> vector<24x128xf32>
    %c8 = arith.constant 8 : index
    %c0_69 = arith.constant 0 : index
    %100 = vector.load %arg11[%c8, %c0_69] : memref<16x128xf32, #tpu.memory_space<vmem>>, vector<1x128xf32>
    %101 = vector.broadcast %100 : vector<1x128xf32> to vector<24x128xf32>
    %102 = arith.addf %99, %101 : vector<24x128xf32>
    %cst_70 = arith.constant 0.000000e+00 : f32
    %103 = vector.broadcast %cst_70 : f32 to vector<24x128xf32>
    %104 = arith.maximumf %102, %103 : vector<24x128xf32>
    %c9 = arith.constant 9 : index
    %c0_71 = arith.constant 0 : index
    %105 = vector.load %arg11[%c9, %c0_71] : memref<16x128xf32, #tpu.memory_space<vmem>>, vector<1x128xf32>
    %106 = vector.broadcast %105 : vector<1x128xf32> to vector<24x128xf32>
    %107 = arith.mulf %104, %106 : vector<24x128xf32>
    %c10 = arith.constant 10 : index
    %c0_72 = arith.constant 0 : index
    %108 = vector.load %arg11[%c10, %c0_72] : memref<16x128xf32, #tpu.memory_space<vmem>>, vector<1x128xf32>
    %109 = vector.broadcast %108 : vector<1x128xf32> to vector<24x128xf32>
    %110 = arith.addf %107, %109 : vector<24x128xf32>
    %c0_73 = arith.constant 0 : index
    %c0_74 = arith.constant 0 : index
    %111 = vector.load %arg5[%c0_73, %c0_74] : memref<24x2xf32, #tpu.memory_space<vmem>>, vector<24x1xf32>
    %112 = vector.broadcast %111 : vector<24x1xf32> to vector<24x128xf32>
    %113 = arith.addf %110, %112 : vector<24x128xf32>
    %cst_75 = arith.constant dense<0xFF800000> : vector<128xf32>
    %114 = vector.multi_reduction <maximumf>, %113, %cst_75 [0] : vector<24x128xf32> to vector<128xf32>
    %115 = vector.shape_cast %114 : vector<128xf32> to vector<1x128xf32>
    %c0_76 = arith.constant 0 : index
    %c1_77 = arith.constant 1 : index
    %116 = vector.load %arg5[%c0_76, %c1_77] : memref<24x2xf32, #tpu.memory_space<vmem>>, vector<24x1xf32>
    %117 = vector.broadcast %116 : vector<24x1xf32> to vector<24x128xf32>
    %118 = arith.addf %110, %117 : vector<24x128xf32>
    %cst_78 = arith.constant dense<0xFF800000> : vector<128xf32>
    %119 = vector.multi_reduction <maximumf>, %118, %cst_78 [0] : vector<24x128xf32> to vector<128xf32>
    %120 = vector.shape_cast %119 : vector<128xf32> to vector<1x128xf32>
    %cst_79 = arith.constant 0.000000e+00 : f32
    %121 = vector.broadcast %cst_79 : f32 to vector<1x128xf32>
    %cst_80 = arith.constant 0.000000e+00 : f32
    %122 = vector.broadcast %cst_80 : f32 to vector<1x128xf32>
    %cst_81 = arith.constant 0.000000e+00 : f32
    %123 = vector.broadcast %cst_81 : f32 to vector<1x128xf32>
    %cst_82 = arith.constant 0.000000e+00 : f32
    %124 = vector.broadcast %cst_82 : f32 to vector<1x128xf32>
    %cst_83 = arith.constant 0.000000e+00 : f32
    %125 = vector.broadcast %cst_83 : f32 to vector<1x128xf32>
    %cst_84 = arith.constant 0.000000e+00 : f32
    %126 = vector.broadcast %cst_84 : f32 to vector<1x128xf32>
    %127 = tpu.concatenate %115, %120, %121, %122, %123, %124, %125, %126 in 0 : vector<1x128xf32>, vector<1x128xf32>, vector<1x128xf32>, vector<1x128xf32>, vector<1x128xf32>, vector<1x128xf32>, vector<1x128xf32>, vector<1x128xf32> -> vector<8x128xf32>
    %128 = arith.truncf %127 : vector<8x128xf32> to vector<8x128xbf16>
    %c5_85 = arith.constant 5 : index
    %c0_86 = arith.constant 0 : index
    %c0_87 = arith.constant 0 : index
    %129 = vector.load %arg9[%c5_85, %c0_86, %c0_87] : memref<9x128x128xbf16, #tpu.memory_space<vmem>>, vector<1x128x128xbf16>
    %130 = vector.shape_cast %129 : vector<1x128x128xbf16> to vector<128x128xbf16>
    %cst_88 = arith.constant dense<0.000000e+00> : vector<8x128xf32>
    %131 = tpu.matmul %128, %130, %cst_88 {dimension_numbers = #tpu.dot_dimension_numbers<[1], [0], [0], [1], [0, 0, 1, 1], [], []>} : vector<8x128xbf16>, vector<128x128xbf16>, vector<8x128xf32> -> vector<8x128xf32>
    %c11 = arith.constant 11 : index
    %c0_89 = arith.constant 0 : index
    %132 = vector.load %arg11[%c11, %c0_89] : memref<16x128xf32, #tpu.memory_space<vmem>>, vector<1x128xf32>
    %133 = vector.broadcast %132 : vector<1x128xf32> to vector<8x128xf32>
    %134 = arith.addf %131, %133 : vector<8x128xf32>
    %cst_90 = arith.constant 0.000000e+00 : f32
    %135 = vector.broadcast %cst_90 : f32 to vector<8x128xf32>
    %136 = arith.maximumf %134, %135 : vector<8x128xf32>
    %137 = arith.truncf %136 : vector<8x128xf32> to vector<8x128xbf16>
    %c6_91 = arith.constant 6 : index
    %c0_92 = arith.constant 0 : index
    %c0_93 = arith.constant 0 : index
    %138 = vector.load %arg9[%c6_91, %c0_92, %c0_93] : memref<9x128x128xbf16, #tpu.memory_space<vmem>>, vector<1x128x128xbf16>
    %139 = vector.shape_cast %138 : vector<1x128x128xbf16> to vector<128x128xbf16>
    %cst_94 = arith.constant dense<0.000000e+00> : vector<8x128xf32>
    %140 = tpu.matmul %137, %139, %cst_94 {dimension_numbers = #tpu.dot_dimension_numbers<[1], [0], [0], [1], [0, 0, 1, 1], [], []>} : vector<8x128xbf16>, vector<128x128xbf16>, vector<8x128xf32> -> vector<8x128xf32>
    %c12 = arith.constant 12 : index
    %c0_95 = arith.constant 0 : index
    %141 = vector.load %arg11[%c12, %c0_95] : memref<16x128xf32, #tpu.memory_space<vmem>>, vector<1x128xf32>
    %142 = vector.broadcast %141 : vector<1x128xf32> to vector<8x128xf32>
    %143 = arith.addf %140, %142 : vector<8x128xf32>
    %cst_96 = arith.constant 0.000000e+00 : f32
    %144 = vector.broadcast %cst_96 : f32 to vector<8x128xf32>
    %145 = arith.maximumf %143, %144 : vector<8x128xf32>
    %146 = tpu.concatenate %55, %145 in 1 : vector<8x128xf32>, vector<8x128xf32> -> vector<8x256xf32>
    %147 = arith.truncf %146 : vector<8x256xf32> to vector<8x256xbf16>
    %c1_97 = arith.constant 1 : index
    %c0_98 = arith.constant 0 : index
    %c0_99 = arith.constant 0 : index
    %148 = vector.load %arg10[%c1_97, %c0_98, %c0_99] : memref<2x256x128xbf16, #tpu.memory_space<vmem>>, vector<1x256x128xbf16>
    %149 = vector.shape_cast %148 : vector<1x256x128xbf16> to vector<256x128xbf16>
    %cst_100 = arith.constant dense<0.000000e+00> : vector<8x128xf32>
    %150 = tpu.matmul %147, %149, %cst_100 {dimension_numbers = #tpu.dot_dimension_numbers<[1], [0], [0], [1], [0, 0, 1, 1], [], []>} : vector<8x256xbf16>, vector<256x128xbf16>, vector<8x128xf32> -> vector<8x128xf32>
    %c13 = arith.constant 13 : index
    %c0_101 = arith.constant 0 : index
    %151 = vector.load %arg11[%c13, %c0_101] : memref<16x128xf32, #tpu.memory_space<vmem>>, vector<1x128xf32>
    %152 = vector.broadcast %151 : vector<1x128xf32> to vector<8x128xf32>
    %153 = arith.addf %150, %152 : vector<8x128xf32>
    %cst_102 = arith.constant 0.000000e+00 : f32
    %154 = vector.broadcast %cst_102 : f32 to vector<8x128xf32>
    %155 = arith.cmpf ogt, %153, %154 : vector<8x128xf32>
    %cst_103 = arith.constant 0.000000e+00 : f32
    %156 = vector.broadcast %cst_103 : f32 to vector<8x128xf32>
    %157 = arith.minimumf %153, %156 : vector<8x128xf32>
    %158 = math.exp %157 : vector<8x128xf32>
    %cst_104 = arith.constant 1.000000e+00 : f32
    %159 = vector.broadcast %cst_104 : f32 to vector<8x128xf32>
    %160 = arith.subf %158, %159 : vector<8x128xf32>
    %161 = arith.select %155, %153, %160 : vector<8x128xi1>, vector<8x128xf32>
    %162 = arith.truncf %161 : vector<8x128xf32> to vector<8x128xbf16>
    %c7_105 = arith.constant 7 : index
    %c0_106 = arith.constant 0 : index
    %c0_107 = arith.constant 0 : index
    %163 = vector.load %arg9[%c7_105, %c0_106, %c0_107] : memref<9x128x128xbf16, #tpu.memory_space<vmem>>, vector<1x128x128xbf16>
    %164 = vector.shape_cast %163 : vector<1x128x128xbf16> to vector<128x128xbf16>
    %cst_108 = arith.constant dense<0.000000e+00> : vector<8x128xf32>
    %165 = tpu.matmul %162, %164, %cst_108 {dimension_numbers = #tpu.dot_dimension_numbers<[1], [0], [0], [1], [0, 0, 1, 1], [], []>} : vector<8x128xbf16>, vector<128x128xbf16>, vector<8x128xf32> -> vector<8x128xf32>
    %c14 = arith.constant 14 : index
    %c0_109 = arith.constant 0 : index
    %166 = vector.load %arg11[%c14, %c0_109] : memref<16x128xf32, #tpu.memory_space<vmem>>, vector<1x128xf32>
    %167 = vector.broadcast %166 : vector<1x128xf32> to vector<8x128xf32>
    %168 = arith.addf %165, %167 : vector<8x128xf32>
    %cst_110 = arith.constant 0.000000e+00 : f32
    %169 = vector.broadcast %cst_110 : f32 to vector<8x128xf32>
    %170 = arith.cmpf ogt, %168, %169 : vector<8x128xf32>
    %cst_111 = arith.constant 0.000000e+00 : f32
    %171 = vector.broadcast %cst_111 : f32 to vector<8x128xf32>
    %172 = arith.minimumf %168, %171 : vector<8x128xf32>
    %173 = math.exp %172 : vector<8x128xf32>
    %cst_112 = arith.constant 1.000000e+00 : f32
    %174 = vector.broadcast %cst_112 : f32 to vector<8x128xf32>
    %175 = arith.subf %173, %174 : vector<8x128xf32>
    %176 = arith.select %170, %168, %175 : vector<8x128xi1>, vector<8x128xf32>
    %177 = arith.truncf %176 : vector<8x128xf32> to vector<8x128xbf16>
    %c8_113 = arith.constant 8 : index
    %c0_114 = arith.constant 0 : index
    %c0_115 = arith.constant 0 : index
    %178 = vector.load %arg9[%c8_113, %c0_114, %c0_115] : memref<9x128x128xbf16, #tpu.memory_space<vmem>>, vector<1x128x128xbf16>
    %179 = vector.shape_cast %178 : vector<1x128x128xbf16> to vector<128x128xbf16>
    %cst_116 = arith.constant dense<0.000000e+00> : vector<8x128xf32>
    %180 = tpu.matmul %177, %179, %cst_116 {dimension_numbers = #tpu.dot_dimension_numbers<[1], [0], [0], [1], [0, 0, 1, 1], [], []>} : vector<8x128xbf16>, vector<128x128xbf16>, vector<8x128xf32> -> vector<8x128xf32>
    %c15 = arith.constant 15 : index
    %c0_117 = arith.constant 0 : index
    %181 = vector.load %arg11[%c15, %c0_117] : memref<16x128xf32, #tpu.memory_space<vmem>>, vector<1x128xf32>
    %182 = vector.broadcast %181 : vector<1x128xf32> to vector<8x128xf32>
    %183 = arith.addf %180, %182 : vector<8x128xf32>
    %c0_118 = arith.constant 0 : index
    %c0_119 = arith.constant 0 : index
    %184 = vector.load %arg12[%c0_118, %c0_119] : memref<8x128xf32, #tpu.memory_space<vmem>>, vector<8x128xf32>
    tpu.vector_store %arg12[%c0_118, %c0_119], %183 {strides = array<i32>} : memref<8x128xf32, #tpu.memory_space<vmem>>, vector<8x128xf32>,
    return
  }
}

</mosaic_0001>

<llo_original>
// kernel: graph_graph_forward.1
$region0: #{graph_graph_forward.1}
  #allocation0 [shape = 'u32[]', space=smem, size = 0x4, offset = 0x4, fixed_abs, tag = 'smem constant byte address 0x4 - core index']
  #allocation1 [shape = 'u32[144,128]{1,0:T(1,128)}', space=vmem, size = 0x12000, scoped, tag = 'internal scratch']
  %s0 = inlined_call_operand.vmem [shape: bf16[32,32], index: 0, kind: input, shape index: {}]
  %s1 = inlined_call_operand.vmem [shape: f32[32,8], index: 1, kind: input, shape index: {}]
  %s2 = inlined_call_operand.vmem [shape: f32[32,2], index: 2, kind: input, shape index: {}]
  %s3 = inlined_call_operand.vmem [shape: bf16[24,24], index: 3, kind: input, shape index: {}]
  %s4 = inlined_call_operand.vmem [shape: f32[24,16], index: 4, kind: input, shape index: {}]
  %s5 = inlined_call_operand.vmem [shape: f32[24,2], index: 5, kind: input, shape index: {}]
  %s6 = inlined_call_operand.vmem [shape: bf16[8,256], index: 6, kind: input, shape index: {}]
  %s7 = inlined_call_operand.vmem [shape: f32[1,256], index: 7, kind: input, shape index: {}]
  %s8 = inlined_call_operand.vmem [shape: bf16[16,128], index: 8, kind: input, shape index: {}]
  %s9 = inlined_call_operand.vmem [shape: bf16[9,128,128], index: 9, kind: input, shape index: {}]
  %s10 = inlined_call_operand.vmem [shape: bf16[2,256,128], index: 10, kind: input, shape index: {}]
  %s11 = inlined_call_operand.vmem [shape: f32[16,128], index: 11, kind: input, shape index: {}]
  %s12 = inlined_call_operand.vmem [shape: f32[8,128], index: 12, kind: output, shape index: {}]
  %s13 = sld [smem:[#allocation0]]
  $region58: #{graph_graph_forward.1} parent=0
    _
  %s15 = ssub.s32 1, %s13
  %s16 = scalar_select 0, %s15, %s13
  // Predicated region
  $region2: #{graph_graph_forward.1} parent=0 // pred_check
    _
  $region3: #{graph_graph_forward.1} parent=0 // pred_check_branch
    %18 = sbr.rel (0) target = $region5
  $region4: #{graph_graph_forward.1} parent=0 // pred_region
    _
  $region5: #{graph_graph_forward.1} parent=0 // pred_fallthru
    _
  // Predicated region
  $region6: #{graph_graph_forward.1} parent=0 // pred_check
    _
  $region7: #{graph_graph_forward.1} parent=0 // pred_check_branch
    %20 = sbr.rel (0) target = $region9
  $region8: #{graph_graph_forward.1} parent=0 // pred_region
    _
  $region9: #{graph_graph_forward.1} parent=0 // pred_fallthru
    _
  // Predicated region
  $region10: #{graph_graph_forward.1} parent=0 // pred_check
    _
  $region11: #{graph_graph_forward.1} parent=0 // pred_check_branch
    %22 = sbr.rel (0) target = $region13
  $region12: #{graph_graph_forward.1} parent=0 // pred_region
    _
  $region13: #{graph_graph_forward.1} parent=0 // pred_fallthru
    _
  // Predicated region
  $region14: #{graph_graph_forward.1} parent=0 // pred_check
    _
  $region15: #{graph_graph_forward.1} parent=0 // pred_check_branch
    %24 = sbr.rel (0) target = $region17
  $region16: #{graph_graph_forward.1} parent=0 // pred_region
    _
  $region17: #{graph_graph_forward.1} parent=0 // pred_fallthru
    _
  // Predicated region
  $region18: #{graph_graph_forward.1} parent=0 // pred_check
    _
  $region19: #{graph_graph_forward.1} parent=0 // pred_check_branch
    %26 = sbr.rel (0) target = $region21
  $region20: #{graph_graph_forward.1} parent=0 // pred_region
    _
  $region21: #{graph_graph_forward.1} parent=0 // pred_fallthru
    _
  // Predicated region
  $region22: #{graph_graph_forward.1} parent=0 // pred_check
    _
  $region23: #{graph_graph_forward.1} parent=0 // pred_check_branch
    %28 = sbr.rel (0) target = $region25
  $region24: #{graph_graph_forward.1} parent=0 // pred_region
    _
  $region25: #{graph_graph_forward.1} parent=0 // pred_fallthru
    _
  // Predicated region
  $region26: #{graph_graph_forward.1} parent=0 // pred_check
    _
  $region27: #{graph_graph_forward.1} parent=0 // pred_check_branch
    %30 = sbr.rel (0) target = $region29
  $region28: #{graph_graph_forward.1} parent=0 // pred_region
    _
  $region29: #{graph_graph_forward.1} parent=0 // pred_fallthru
    _
  // Predicated region
  $region30: #{graph_graph_forward.1} parent=0 // pred_check
    _
  $region31: #{graph_graph_forward.1} parent=0 // pred_check_branch
    %32 = sbr.rel (0) target = $region33
  $region32: #{graph_graph_forward.1} parent=0 // pred_region
    _
  $region33: #{graph_graph_forward.1} parent=0 // pred_fallthru
    _
  // Predicated region
  $region34: #{graph_graph_forward.1} parent=0 // pred_check
    _
  $region35: #{graph_graph_forward.1} parent=0 // pred_check_branch
    %34 = sbr.rel (0) target = $region37
  $region36: #{graph_graph_forward.1} parent=0 // pred_region
    _
  $region37: #{graph_graph_forward.1} parent=0 // pred_fallthru
    _
  // Predicated region
  $region38: #{graph_graph_forward.1} parent=0 // pred_check
    _
  $region39: #{graph_graph_forward.1} parent=0 // pred_check_branch
    %36 = sbr.rel (0) target = $region41
  $region40: #{graph_graph_forward.1} parent=0 // pred_region
    _
  $region41: #{graph_graph_forward.1} parent=0 // pred_fallthru
    _
  // Predicated region
  $region42: #{graph_graph_forward.1} parent=0 // pred_check
    _
  $region43: #{graph_graph_forward.1} parent=0 // pred_check_branch
    %38 = sbr.rel (0) target = $region45
  $region44: #{graph_graph_forward.1} parent=0 // pred_region
    _
  $region45: #{graph_graph_forward.1} parent=0 // pred_fallthru
    _
  // Predicated region
  $region46: #{graph_graph_forward.1} parent=0 // pred_check
    _
  $region47: #{graph_graph_forward.1} parent=0 // pred_check_branch
    %40 = sbr.rel (0) target = $region49
  $region48: #{graph_graph_forward.1} parent=0 // pred_region
    _
  $region49: #{graph_graph_forward.1} parent=0 // pred_fallthru
    _
  %v42 = vld [vmem:[%s0] sm:$0xf]
  %v43 = vld [vmem:[%s0 + $0x4] sm:$0xf]
  %v44 = vld [vmem:[%s0 + $0x8] sm:$0xf]
  %v45 = vld [vmem:[%s0 + $0xc] sm:$0xf]
  %v46 = vld [vmem:[%s1] sm:$0xff]
  %v47 = vld [vmem:[%s1 + $0x8] sm:$0xff]
  %v48 = vld [vmem:[%s1 + $0x10] sm:$0xff]
  %v49 = vld [vmem:[%s1 + $0x18] sm:$0xff]
  %v50 = vpack.c.bf16 %v47, %v46
  %v51 = vpack.c.bf16 %v49, %v48
  %v56 = vunpack.c.l.b16 %v42
  %v57 = vunpack.c.l.b16 %v43
  %v58 = vunpack.c.l.b16 %v44
  %v59 = vunpack.c.l.b16 %v45
  %v60 = vpack.c.b16 %v57, %v56
  %v61 = vpack.c.b16 %v59, %v58
  %vm62 = vcmask 261120
  %v64 = vsel %vm62, %v60, 0
  %v67 = vsel %vm62, %v61, 0
  %69 = vmatprep.subr.bf16.mxu0 0
  %70 = vmatpush1.bf16.msra.mxu0 %v50
  %71 = vmatprep.subr.bf16.mxu0 0
  %72 = vmatpush1.bf16.msra.mxu0 %v51
  %73 = vmatprep.subr.bf16.mxu0 0
  %74 = vmatpush1.bf16.msra.mxu0 0
  %75 = vmatprep.subr.bf16.mxu0 0
  %76 = vmatpush1.bf16.msra.mxu0 0
  %77 = vmatprep.subr.bf16.mxu0 0
  %78 = vmatpush1.bf16.msra.mxu0 0
  %79 = vmatprep.subr.bf16.mxu0 0
  %80 = vmatpush1.bf16.msra.mxu0 0
  %81 = vmatprep.subr.bf16.mxu0 0
  %82 = vmatpush1.bf16.msra.mxu0 0
  %83 = vmatprep.subr.bf16.mxu0 0
  %84 = vmatpush1.bf16.msra.mxu0 0
  %85 = vmatprep.subr.bf16.mxu0 0
  %86 = vmatpush1.bf16.msra.mxu0 0
  %87 = vmatprep.subr.bf16.mxu0 0
  %88 = vmatpush1.bf16.msra.mxu0 0
  %89 = vmatprep.subr.bf16.mxu0 0
  %90 = vmatpush1.bf16.msra.mxu0 0
  %91 = vmatprep.subr.bf16.mxu0 0
  %92 = vmatpush1.bf16.msra.mxu0 0
  %93 = vmatprep.subr.bf16.mxu0 0
  %94 = vmatpush1.bf16.msra.mxu0 0
  %95 = vmatprep.subr.bf16.mxu0 0
  %96 = vmatpush1.bf16.msra.mxu0 0
  %97 = vmatprep.subr.bf16.mxu0 0
  %98 = vmatpush1.bf16.msra.mxu0 0
  %99 = vmatprep.subr.bf16.mxu0 0
  %100 = vmatpush1.bf16.msra.mxu0 0
  %101 = vmatprep.mubr.bf16.mxu0 0
  %102 = vmatmul.mubr.bf16.gmra.mrb[0].mxu0 %v64
  %v103 = vpop.f32.mrb[0].mxu0
  %v104 = vadd.f32 0.0, %v103
  %v105 = vpop.f32.mrb[0].mxu0
  %v106 = vpop.f32.mrb[0].mxu0
  %v107 = vadd.f32 0.0, %v106
  %v108 = vpop.f32.mrb[0].mxu0
  %109 = vmatprep.mubr.bf16.mxu0 0
  %110 = vmatmul.mubr.bf16.gmra.mrb[0].mxu0 %v67
  %v111 = vpop.f32.mrb[0].mxu0
  %v112 = vadd.f32 0.0, %v111
  %v113 = vpop.f32.mrb[0].mxu0
  %v114 = vpop.f32.mrb[0].mxu0
  %v115 = vadd.f32 0.0, %v114
  %v116 = vpop.f32.mrb[0].mxu0
  %117 = vdwg.mxu0
  %v118 = vpack.c.bf16 %v107, %v104
  %v119 = vpack.c.bf16 %v115, %v112
  %v120 = vld [vmem:[%s6] sm:$0xff]
  %v121 = vld [vmem:[%s7] sm:$0x3]
  %v123 = vlaneseq
  %v124 = vshrl.u32 %v123, 7
  %v125 = vsub.s32 0, %v124
  %v126 = vrot.slane %v121, %v125
  %v127 = vlaneseq
  %v128 = vshrl.u32 %v127, 7
  %v129 = vsub.s32 1, %v128
  %v130 = vrot.slane %v121, %v129
  %v134 = vunpack.c.l.b16 %v120
  %v135 = vunpack.c.h.b16 %v120
  %v136 = vpack.c.b16 %v134, %v134
  %v137 = vpack.c.b16 %v135, %v135
  %vm138 = vcmask 64512
  %v140 = vsel %vm138, %v118, 0
  %v143 = vsel %vm138, %v119, 0
  %vm145 = vcmask 1043456
  %v147 = vsel %vm145, %v136, 0
  %v150 = vsel %vm145, %v137, 0
  %152 = vmatprep.subr.bf16.mxu0 %v150
  %153 = vmatpush1.bf16.msra.mxu0 %v147
  %154 = vmatprep.subr.bf16.mxu0 0
  %155 = vmatpush1.bf16.msra.mxu0 0
  %156 = vmatprep.subr.bf16.mxu0 0
  %157 = vmatpush1.bf16.msra.mxu0 0
  %158 = vmatprep.subr.bf16.mxu0 0
  %159 = vmatpush1.bf16.msra.mxu0 0
  %160 = vmatprep.subr.bf16.mxu0 0
  %161 = vmatpush1.bf16.msra.mxu0 0
  %162 = vmatprep.subr.bf16.mxu0 0
  %163 = vmatpush1.bf16.msra.mxu0 0
  %164 = vmatprep.subr.bf16.mxu0 0
  %165 = vmatpush1.bf16.msra.mxu0 0
  %166 = vmatprep.subr.bf16.mxu0 0
  %167 = vmatpush1.bf16.msra.mxu0 0
  %168 = vmatprep.subr.bf16.mxu0 0
  %169 = vmatpush1.bf16.msra.mxu0 0
  %170 = vmatprep.subr.bf16.mxu0 0
  %171 = vmatpush1.bf16.msra.mxu0 0
  %172 = vmatprep.subr.bf16.mxu0 0
  %173 = vmatpush1.bf16.msra.mxu0 0
  %174 = vmatprep.subr.bf16.mxu0 0
  %175 = vmatpush1.bf16.msra.mxu0 0
  %176 = vmatprep.subr.bf16.mxu0 0
  %177 = vmatpush1.bf16.msra.mxu0 0
  %178 = vmatprep.subr.bf16.mxu0 0
  %179 = vmatpush1.bf16.msra.mxu0 0
  %180 = vmatprep.subr.bf16.mxu0 0
  %181 = vmatpush1.bf16.msra.mxu0 0
  %182 = vmatprep.subr.bf16.mxu0 0
  %183 = vmatpush1.bf16.msra.mxu0 0
  %184 = vmatprep.mubr.bf16.mxu0 0
  %185 = vmatmul.mubr.bf16.gmra.mrb[0].mxu0 %v140
  %v186 = vpop.f32.mrb[0].mxu0
  %v187 = vadd.f32 %v126, %v186
  %v188 = vpop.f32.mrb[0].mxu0
  %v189 = vadd.f32 %v130, %v188
  %v190 = vpop.f32.mrb[0].mxu0
  %v191 = vadd.f32 %v126, %v190
  %v192 = vpop.f32.mrb[0].mxu0
  %v193 = vadd.f32 %v130, %v192
  %194 = vmatprep.mubr.bf16.mxu0 0
  %195 = vmatmul.mubr.bf16.gmra.mrb[0].mxu0 %v143
  %v196 = vpop.f32.mrb[0].mxu0
  %v197 = vadd.f32 %v126, %v196
  %v198 = vpop.f32.mrb[0].mxu0
  %v199 = vadd.f32 %v130, %v198
  %v200 = vpop.f32.mrb[0].mxu0
  %v201 = vadd.f32 %v126, %v200
  %v202 = vpop.f32.mrb[0].mxu0
  %v203 = vadd.f32 %v130, %v202
  %204 = vdwg.mxu0
  %v205 = vmax.f32 %v187, 0.0
  %v206 = vmax.f32 %v189, 0.0
  %v207 = vmax.f32 %v191, 0.0
  %v208 = vmax.f32 %v193, 0.0
  %v209 = vmax.f32 %v197, 0.0
  %v210 = vmax.f32 %v199, 0.0
  %v211 = vmax.f32 %v201, 0.0
  %v212 = vmax.f32 %v203, 0.0
  %v213 = vpack.c.bf16 %v207, %v205
  %v214 = vpack.c.bf16 %v208, %v206
  %v215 = vpack.c.bf16 %v211, %v209
  %v216 = vpack.c.bf16 %v212, %v210
  %v217 = vld [vmem:[%s10] sm:$0xf]
  %v218 = vld [vmem:[%s10 + $0x4] sm:$0xf]
  %v219 = vld [vmem:[%s10 + $0x8] sm:$0xf]
  %v220 = vld [vmem:[%s10 + $0xc] sm:$0xf]
  %v221 = vld [vmem:[%s10 + $0x10] sm:$0xf]
  %v222 = vld [vmem:[%s10 + $0x14] sm:$0xf]
  %v223 = vld [vmem:[%s10 + $0x18] sm:$0xf]
  %v224 = vld [vmem:[%s10 + $0x1c] sm:$0xf]
  %v225 = vld [vmem:[%s10 + $0x20] sm:$0xf]
  %v226 = vld [vmem:[%s10 + $0x24] sm:$0xf]
  %v227 = vld [vmem:[%s10 + $0x28] sm:$0xf]
  %v228 = vld [vmem:[%s10 + $0x2c] sm:$0xf]
  %v229 = vld [vmem:[%s10 + $0x30] sm:$0xf]
  %v230 = vld [vmem:[%s10 + $0x34] sm:$0xf]
  %v231 = vld [vmem:[%s10 + $0x38] sm:$0xf]
  %v232 = vld [vmem:[%s10 + $0x3c] sm:$0xf]
  %v233 = vld [vmem:[%s10 + $0x40] sm:$0xf]
  %v234 = vld [vmem:[%s10 + $0x44] sm:$0xf]
  %v235 = vld [vmem:[%s10 + $0x48] sm:$0xf]
  %v236 = vld [vmem:[%s10 + $0x4c] sm:$0xf]
  %v237 = vld [vmem:[%s10 + $0x50] sm:$0xf]
  %v238 = vld [vmem:[%s10 + $0x54] sm:$0xf]
  %v239 = vld [vmem:[%s10 + $0x58] sm:$0xf]
  %v240 = vld [vmem:[%s10 + $0x5c] sm:$0xf]
  %v241 = vld [vmem:[%s10 + $0x60] sm:$0xf]
  %v242 = vld [vmem:[%s10 + $0x64] sm:$0xf]
  %v243 = vld [vmem:[%s10 + $0x68] sm:$0xf]
  %v244 = vld [vmem:[%s10 + $0x6c] sm:$0xf]
  %v245 = vld [vmem:[%s10 + $0x70] sm:$0xf]
  %v246 = vld [vmem:[%s10 + $0x74] sm:$0xf]
  %v247 = vld [vmem:[%s10 + $0x78] sm:$0xf]
  %v248 = vld [vmem:[%s10 + $0x7c] sm:$0xf]
  %v281 = vunpack.c.l.b16 %v217
  %v282 = vunpack.c.l.b16 %v218
  %v283 = vunpack.c.l.b16 %v219
  %v284 = vunpack.c.l.b16 %v220
  %v285 = vunpack.c.l.b16 %v221
  %v286 = vunpack.c.l.b16 %v222
  %v287 = vunpack.c.l.b16 %v223
  %v288 = vunpack.c.l.b16 %v224
  %v289 = vunpack.c.l.b16 %v225
  %v290 = vunpack.c.l.b16 %v226
  %v291 = vunpack.c.l.b16 %v227
  %v292 = vunpack.c.l.b16 %v228
  %v293 = vunpack.c.l.b16 %v229
  %v294 = vunpack.c.l.b16 %v230
  %v295 = vunpack.c.l.b16 %v231
  %v296 = vunpack.c.l.b16 %v232
  %v297 = vunpack.c.l.b16 %v233
  %v298 = vunpack.c.l.b16 %v234
  %v299 = vunpack.c.l.b16 %v235
  %v300 = vunpack.c.l.b16 %v236
  %v301 = vunpack.c.l.b16 %v237
  %v302 = vunpack.c.l.b16 %v238
  %v303 = vunpack.c.l.b16 %v239
  %v304 = vunpack.c.l.b16 %v240
  %v305 = vunpack.c.l.b16 %v241
  %v306 = vunpack.c.l.b16 %v242
  %v307 = vunpack.c.l.b16 %v243
  %v308 = vunpack.c.l.b16 %v244
  %v309 = vunpack.c.l.b16 %v245
  %v310 = vunpack.c.l.b16 %v246
  %v311 = vunpack.c.l.b16 %v247
  %v312 = vunpack.c.l.b16 %v248
  %v313 = vpack.c.b16 %v282, %v281
  %v314 = vpack.c.b16 %v284, %v283
  %v315 = vpack.c.b16 %v286, %v285
  %v316 = vpack.c.b16 %v288, %v287
  %v317 = vpack.c.b16 %v290, %v289
  %v318 = vpack.c.b16 %v292, %v291
  %v319 = vpack.c.b16 %v294, %v293
  %v320 = vpack.c.b16 %v296, %v295
  %v321 = vpack.c.b16 %v298, %v297
  %v322 = vpack.c.b16 %v300, %v299
  %v323 = vpack.c.b16 %v302, %v301
  %v324 = vpack.c.b16 %v304, %v303
  %v325 = vpack.c.b16 %v306, %v305
  %v326 = vpack.c.b16 %v308, %v307
  %v327 = vpack.c.b16 %v310, %v309
  %v328 = vpack.c.b16 %v312, %v311
  %345 = vmatprep.subr.bf16.mxu0 0
  %346 = vmatpush1.bf16.msra.mxu0 %v313
  %347 = vmatprep.subr.bf16.mxu0 0
  %348 = vmatpush1.bf16.msra.mxu0 %v314
  %349 = vmatprep.subr.bf16.mxu0 0
  %350 = vmatpush1.bf16.msra.mxu0 %v315
  %351 = vmatprep.subr.bf16.mxu0 0
  %352 = vmatpush1.bf16.msra.mxu0 %v316
  %353 = vmatprep.subr.bf16.mxu0 0
  %354 = vmatpush1.bf16.msra.mxu0 %v317
  %355 = vmatprep.subr.bf16.mxu0 0
  %356 = vmatpush1.bf16.msra.mxu0 %v318
  %357 = vmatprep.subr.bf16.mxu0 0
  %358 = vmatpush1.bf16.msra.mxu0 %v319
  %359 = vmatprep.subr.bf16.mxu0 0
  %360 = vmatpush1.bf16.msra.mxu0 %v320
  %361 = vmatprep.subr.bf16.mxu0 0
  %362 = vmatpush1.bf16.msra.mxu0 %v321
  %363 = vmatprep.subr.bf16.mxu0 0
  %364 = vmatpush1.bf16.msra.mxu0 %v322
  %365 = vmatprep.subr.bf16.mxu0 0
  %366 = vmatpush1.bf16.msra.mxu0 %v323
  %367 = vmatprep.subr.bf16.mxu0 0
  %368 = vmatpush1.bf16.msra.mxu0 %v324
  %369 = vmatprep.subr.bf16.mxu0 0
  %370 = vmatpush1.bf16.msra.mxu0 %v325
  %371 = vmatprep.subr.bf16.mxu0 0
  %372 = vmatpush1.bf16.msra.mxu0 %v326
  %373 = vmatprep.subr.bf16.mxu0 0
  %374 = vmatpush1.bf16.msra.mxu0 %v327
  %375 = vmatprep.subr.bf16.mxu0 0
  %376 = vmatpush1.bf16.msra.mxu0 %v328
  %377 = vmatprep.mubr.bf16.mxu0 %v214
  %378 = vmatmul.mubr.bf16.gmra.mrb[0].mxu0 %v213
  %v379 = vpop.f32.mrb[0].mxu0
  %v380 = vadd.f32 0.0, %v379
  %v381 = vpop.f32.mrb[0].mxu0
  %v382 = vpop.f32.mrb[0].mxu0
  %v383 = vadd.f32 0.0, %v382
  %v384 = vpop.f32.mrb[0].mxu0
  %385 = vmatprep.mubr.bf16.mxu0 %v216
  %386 = vmatmul.mubr.bf16.gmra.mrb[0].mxu0 %v215
  %v387 = vpop.f32.mrb[0].mxu0
  %v388 = vadd.f32 0.0, %v387
  %v389 = vpop.f32.mrb[0].mxu0
  %v390 = vpop.f32.mrb[0].mxu0
  %v391 = vadd.f32 0.0, %v390
  %v392 = vpop.f32.mrb[0].mxu0
  %393 = vdwg.mxu0
  %v394 = vpack.c.bf16 %v383, %v380
  %v395 = vpack.c.bf16 %v391, %v388
  %v396 = vld [vmem:[%s11] sm:$0x1]
  %v397 = vlaneseq
  %v398 = vshrl.u32 %v397, 7
  %v399 = vsub.s32 0, %v398
  %v400 = vrot.slane %v396, %v399
  %401 = vmatprep.subr.bf16.mxu0 0
  %402 = vmatpush1.bf16.msra.mxu0 %v394
  %403 = vmatprep.subr.bf16.mxu0 0
  %404 = vmatpush1.bf16.msra.mxu0 %v395
  %405 = vmatprep.subr.bf16.mxu0 0
  %406 = vmatpush1.bf16.msra.mxu0 0
  %407 = vmatprep.subr.bf16.mxu0 0
  %408 = vmatpush1.bf16.msra.mxu0 0
  %409 = vmatprep.subr.bf16.mxu0 0
  %410 = vmatpush1.bf16.msra.mxu0 0
  %411 = vmatprep.subr.bf16.mxu0 0
  %412 = vmatpush1.bf16.msra.mxu0 0
  %413 = vmatprep.subr.bf16.mxu0 0
  %414 = vmatpush1.bf16.msra.mxu0 0
  %415 = vmatprep.subr.bf16.mxu0 0
  %416 = vmatpush1.bf16.msra.mxu0 0
  %417 = vmatprep.subr.bf16.mxu0 0
  %418 = vmatpush1.bf16.msra.mxu0 0
  %419 = vmatprep.subr.bf16.mxu0 0
  %420 = vmatpush1.bf16.msra.mxu0 0
  %421 = vmatprep.subr.bf16.mxu0 0
  %422 = vmatpush1.bf16.msra.mxu0 0
  %423 = vmatprep.subr.bf16.mxu0 0
  %424 = vmatpush1.bf16.msra.mxu0 0
  %425 = vmatprep.subr.bf16.mxu0 0
  %426 = vmatpush1.bf16.msra.mxu0 0
  %427 = vmatprep.subr.bf16.mxu0 0
  %428 = vmatpush1.bf16.msra.mxu0 0
  %429 = vmatprep.subr.bf16.mxu0 0
  %430 = vmatpush1.bf16.msra.mxu0 0
  %431 = vmatprep.subr.bf16.mxu0 0
  %432 = vmatpush1.bf16.msra.mxu0 0
  %433 = vmatprep.mubr.bf16.mxu0 0
  %434 = vmatmul.mubr.bf16.gmra.mrb[0].mxu0 %v64
  %v435 = vpop.f32.mrb[0].mxu0
  %v436 = vadd.f32 %v400, %v435
  %v437 = vpop.f32.mrb[0].mxu0
  %v438 = vpop.f32.mrb[0].mxu0
  %v439 = vadd.f32 %v400, %v438
  %v440 = vpop.f32.mrb[0].mxu0
  %441 = vmatprep.mubr.bf16.mxu0 0
  %442 = vmatmul.mubr.bf16.gmra.mrb[0].mxu0 %v67
  %v443 = vpop.f32.mrb[0].mxu0
  %v444 = vadd.f32 %v400, %v443
  %v445 = vpop.f32.mrb[0].mxu0
  %v446 = vpop.f32.mrb[0].mxu0
  %v447 = vadd.f32 %v400, %v446
  %v448 = vpop.f32.mrb[0].mxu0
  %449 = vdwg.mxu0
  %v450 = vld [vmem:[%s2] sm:$0xff]
  %v451 = vld [vmem:[%s2 + $0x8] sm:$0xff]
  %v452 = vld [vmem:[%s2 + $0x10] sm:$0xff]
  %v453 = vld [vmem:[%s2 + $0x18] sm:$0xff]
  %455 = vset.pattern.permute.xlu0 0
  %456 = vperm.xlu0 %455, %v450
  %v457 = vpop.permute.xlu0 %456
  %460 = vset.pattern.permute.xlu0 0
  %461 = vperm.xlu0 %460, %v451
  %v462 = vpop.permute.xlu0 %461
  %465 = vset.pattern.permute.xlu0 0
  %466 = vperm.xlu0 %465, %v452
  %v467 = vpop.permute.xlu0 %466
  %470 = vset.pattern.permute.xlu0 0
  %471 = vperm.xlu0 %470, %v453
  %v472 = vpop.permute.xlu0 %471
  %v474 = vadd.f32 %v436, %v457
  %v475 = vadd.f32 %v439, %v462
  %v476 = vadd.f32 %v444, %v467
  %v477 = vadd.f32 %v447, %v472
  %v478 = vmax.f32 %v474, %v475
  %v479 = vmax.f32 %v476, %v477
  %v480 = vmax.f32 %v478, %v479
  %v481 = vrot.slane %v480, 4
  %v482 = vmax.f32 %v480, %v481
  %v483 = vrot.slane %v482, 2
  %v484 = vmax.f32 %v482, %v483
  %v485 = vrot.slane %v484, 1
  %v486 = vmax.f32 %v484, %v485
  %487 = vset.pattern.permute.xlu0 1
  %488 = vperm.xlu0 %487, %v450
  %v489 = vpop.permute.xlu0 %488
  %491 = vset.pattern.permute.xlu0 1
  %492 = vperm.xlu0 %491, %v451
  %v493 = vpop.permute.xlu0 %492
  %495 = vset.pattern.permute.xlu0 1
  %496 = vperm.xlu0 %495, %v452
  %v497 = vpop.permute.xlu0 %496
  %499 = vset.pattern.permute.xlu0 1
  %500 = vperm.xlu0 %499, %v453
  %v501 = vpop.permute.xlu0 %500
  %v503 = vadd.f32 %v436, %v489
  %v504 = vadd.f32 %v439, %v493
  %v505 = vadd.f32 %v444, %v497
  %v506 = vadd.f32 %v447, %v501
  %v507 = vmax.f32 %v503, %v504
  %v508 = vmax.f32 %v505, %v506
  %v509 = vmax.f32 %v507, %v508
  %v510 = vrot.slane %v509, 4
  %v511 = vmax.f32 %v509, %v510
  %v512 = vrot.slane %v511, 2
  %v513 = vmax.f32 %v511, %v512
  %v514 = vrot.slane %v513, 1
  %v515 = vmax.f32 %v513, %v514
  %vm516 = vcmask 1040384
  %v517 = vsel %vm516, %v486, %v515
  %vm518 = vcmask 1041408
  %v519 = vsel %vm518, %v517, 0.0
  %vm520 = vcmask 1042432
  %v521 = vsel %vm520, %v519, 0.0
  %v522 = vsel %vm145, %v521, 0.0
  %vm523 = vcmask 1044480
  %v524 = vsel %vm523, %v522, 0.0
  %vm525 = vcmask 1045504
  %v526 = vsel %vm525, %v524, 0.0
  %vm527 = vcmask 1046528
  %v528 = vsel %vm527, %v526, 0.0
  %v529 = vpack.c.bf16 %v528, %v528
  %v530 = vld [vmem:[%s9] sm:$0xf]
  %v531 = vld [vmem:[%s9 + $0x4] sm:$0xf]
  %v532 = vld [vmem:[%s9 + $0x8] sm:$0xf]
  %v533 = vld [vmem:[%s9 + $0xc] sm:$0xf]
  %v534 = vld [vmem:[%s9 + $0x10] sm:$0xf]
  %v535 = vld [vmem:[%s9 + $0x14] sm:$0xf]
  %v536 = vld [vmem:[%s9 + $0x18] sm:$0xf]
  %v537 = vld [vmem:[%s9 + $0x1c] sm:$0xf]
  %v538 = vld [vmem:[%s9 + $0x20] sm:$0xf]
  %v539 = vld [vmem:[%s9 + $0x24] sm:$0xf]
  %v540 = vld [vmem:[%s9 + $0x28] sm:$0xf]
  %v541 = vld [vmem:[%s9 + $0x2c] sm:$0xf]
  %v542 = vld [vmem:[%s9 + $0x30] sm:$0xf]
  %v543 = vld [vmem:[%s9 + $0x34] sm:$0xf]
  %v544 = vld [vmem:[%s9 + $0x38] sm:$0xf]
  %v545 = vld [vmem:[%s9 + $0x3c] sm:$0xf]
  %v546 = vld [vmem:[%s11 + $0x1] sm:$0x1]
  %v547 = vlaneseq
  %v548 = vshrl.u32 %v547, 7
  %v549 = vsub.s32 0, %v548
  %v550 = vrot.slane %v546, %v549
  %v567 = vunpack.c.l.b16 %v530
  %v568 = vunpack.c.l.b16 %v531
  %v569 = vunpack.c.l.b16 %v532
  %v570 = vunpack.c.l.b16 %v533
  %v571 = vunpack.c.l.b16 %v534
  %v572 = vunpack.c.l.b16 %v535
  %v573 = vunpack.c.l.b16 %v536
  %v574 = vunpack.c.l.b16 %v537
  %v575 = vunpack.c.l.b16 %v538
  %v576 = vunpack.c.l.b16 %v539
  %v577 = vunpack.c.l.b16 %v540
  %v578 = vunpack.c.l.b16 %v541
  %v579 = vunpack.c.l.b16 %v542
  %v580 = vunpack.c.l.b16 %v543
  %v581 = vunpack.c.l.b16 %v544
  %v582 = vunpack.c.l.b16 %v545
  %v583 = vpack.c.b16 %v568, %v567
  %v584 = vpack.c.b16 %v570, %v569
  %v585 = vpack.c.b16 %v572, %v571
  %v586 = vpack.c.b16 %v574, %v573
  %v587 = vpack.c.b16 %v576, %v575
  %v588 = vpack.c.b16 %v578, %v577
  %v589 = vpack.c.b16 %v580, %v579
  %v590 = vpack.c.b16 %v582, %v581
  %599 = vmatprep.subr.bf16.mxu0 0
  %600 = vmatpush1.bf16.msra.mxu0 %v583
  %601 = vmatprep.subr.bf16.mxu0 0
  %602 = vmatpush1.bf16.msra.mxu0 %v584
  %603 = vmatprep.subr.bf16.mxu0 0
  %604 = vmatpush1.bf16.msra.mxu0 %v585
  %605 = vmatprep.subr.bf16.mxu0 0
  %606 = vmatpush1.bf16.msra.mxu0 %v586
  %607 = vmatprep.subr.bf16.mxu0 0
  %608 = vmatpush1.bf16.msra.mxu0 %v587
  %609 = vmatprep.subr.bf16.mxu0 0
  %610 = vmatpush1.bf16.msra.mxu0 %v588
  %611 = vmatprep.subr.bf16.mxu0 0
  %612 = vmatpush1.bf16.msra.mxu0 %v589
  %613 = vmatprep.subr.bf16.mxu0 0
  %614 = vmatpush1.bf16.msra.mxu0 %v590
  %615 = vmatprep.subr.bf16.mxu0 0
  %616 = vmatpush1.bf16.msra.mxu0 0
  %617 = vmatprep.subr.bf16.mxu0 0
  %618 = vmatpush1.bf16.msra.mxu0 0
  %619 = vmatprep.subr.bf16.mxu0 0
  %620 = vmatpush1.bf16.msra.mxu0 0
  %621 = vmatprep.subr.bf16.mxu0 0
  %622 = vmatpush1.bf16.msra.mxu0 0
  %623 = vmatprep.subr.bf16.mxu0 0
  %624 = vmatpush1.bf16.msra.mxu0 0
  %625 = vmatprep.subr.bf16.mxu0 0
  %626 = vmatpush1.bf16.msra.mxu0 0
  %627 = vmatprep.subr.bf16.mxu0 0
  %628 = vmatpush1.bf16.msra.mxu0 0
  %629 = vmatprep.subr.bf16.mxu0 0
  %630 = vmatpush1.bf16.msra.mxu0 0
  %631 = vmatprep.mubr.bf16.mxu0 0
  %632 = vmatmul.mubr.bf16.gmra.mrb[0].mxu0 %v529
  %v633 = vpop.f32.mrb[0].mxu0
  %v634 = vadd.f32 %v550, %v633
  %v635 = vpop.f32.mrb[0].mxu0
  %v636 = vpop.f32.mrb[0].mxu0
  %v637 = vpop.f32.mrb[0].mxu0
  %638 = vdwg.mxu0
  %v639 = vmax.f32 %v634, 0.0
  %v640 = vpack.c.bf16 %v639, %v639
  %s641 = scalar_lea.vmem %s9, 64
  %v642 = vld [vmem:[%s641] sm:$0xf]
  %v643 = vld [vmem:[%s641 + $0x4] sm:$0xf]
  %v644 = vld [vmem:[%s641 + $0x8] sm:$0xf]
  %v645 = vld [vmem:[%s641 + $0xc] sm:$0xf]
  %v646 = vld [vmem:[%s641 + $0x10] sm:$0xf]
  %v647 = vld [vmem:[%s641 + $0x14] sm:$0xf]
  %v648 = vld [vmem:[%s641 + $0x18] sm:$0xf]
  %v649 = vld [vmem:[%s641 + $0x1c] sm:$0xf]
  %v650 = vld [vmem:[%s641 + $0x20] sm:$0xf]
  %v651 = vld [vmem:[%s641 + $0x24] sm:$0xf]
  %v652 = vld [vmem:[%s641 + $0x28] sm:$0xf]
  %v653 = vld [vmem:[%s641 + $0x2c] sm:$0xf]
  %v654 = vld [vmem:[%s641 + $0x30] sm:$0xf]
  %v655 = vld [vmem:[%s641 + $0x34] sm:$0xf]
  %v656 = vld [vmem:[%s641 + $0x38] sm:$0xf]
  %v657 = vld [vmem:[%s641 + $0x3c] sm:$0xf]
  %v658 = vld [vmem:[%s11 + $0x2] sm:$0x1]
  %v659 = vlaneseq
  %v660 = vshrl.u32 %v659, 7
  %v661 = vsub.s32 0, %v660
  %v662 = vrot.slane %v658, %v661
  %v679 = vunpack.c.l.b16 %v642
  %v680 = vunpack.c.l.b16 %v643
  %v681 = vunpack.c.l.b16 %v644
  %v682 = vunpack.c.l.b16 %v645
  %v683 = vunpack.c.l.b16 %v646
  %v684 = vunpack.c.l.b16 %v647
  %v685 = vunpack.c.l.b16 %v648
  %v686 = vunpack.c.l.b16 %v649
  %v687 = vunpack.c.l.b16 %v650
  %v688 = vunpack.c.l.b16 %v651
  %v689 = vunpack.c.l.b16 %v652
  %v690 = vunpack.c.l.b16 %v653
  %v691 = vunpack.c.l.b16 %v654
  %v692 = vunpack.c.l.b16 %v655
  %v693 = vunpack.c.l.b16 %v656
  %v694 = vunpack.c.l.b16 %v657
  %v695 = vpack.c.b16 %v680, %v679
  %v696 = vpack.c.b16 %v682, %v681
  %v697 = vpack.c.b16 %v684, %v683
  %v698 = vpack.c.b16 %v686, %v685
  %v699 = vpack.c.b16 %v688, %v687
  %v700 = vpack.c.b16 %v690, %v689
  %v701 = vpack.c.b16 %v692, %v691
  %v702 = vpack.c.b16 %v694, %v693
  %711 = vmatprep.subr.bf16.mxu0 0
  %712 = vmatpush1.bf16.msra.mxu0 %v695
  %713 = vmatprep.subr.bf16.mxu0 0
  %714 = vmatpush1.bf16.msra.mxu0 %v696
  %715 = vmatprep.subr.bf16.mxu0 0
  %716 = vmatpush1.bf16.msra.mxu0 %v697
  %717 = vmatprep.subr.bf16.mxu0 0
  %718 = vmatpush1.bf16.msra.mxu0 %v698
  %719 = vmatprep.subr.bf16.mxu0 0
  %720 = vmatpush1.bf16.msra.mxu0 %v699
  %721 = vmatprep.subr.bf16.mxu0 0
  %722 = vmatpush1.bf16.msra.mxu0 %v700
  %723 = vmatprep.subr.bf16.mxu0 0
  %724 = vmatpush1.bf16.msra.mxu0 %v701
  %725 = vmatprep.subr.bf16.mxu0 0
  %726 = vmatpush1.bf16.msra.mxu0 %v702
  %727 = vmatprep.subr.bf16.mxu0 0
  %728 = vmatpush1.bf16.msra.mxu0 0
  %729 = vmatprep.subr.bf16.mxu0 0
  %730 = vmatpush1.bf16.msra.mxu0 0
  %731 = vmatprep.subr.bf16.mxu0 0
  %732 = vmatpush1.bf16.msra.mxu0 0
  %733 = vmatprep.subr.bf16.mxu0 0
  %734 = vmatpush1.bf16.msra.mxu0 0
  %735 = vmatprep.subr.bf16.mxu0 0
  %736 = vmatpush1.bf16.msra.mxu0 0
  %737 = vmatprep.subr.bf16.mxu0 0
  %738 = vmatpush1.bf16.msra.mxu0 0
  %739 = vmatprep.subr.bf16.mxu0 0
  %740 = vmatpush1.bf16.msra.mxu0 0
  %741 = vmatprep.subr.bf16.mxu0 0
  %742 = vmatpush1.bf16.msra.mxu0 0
  %743 = vmatprep.mubr.bf16.mxu0 0
  %744 = vmatmul.mubr.bf16.gmra.mrb[0].mxu0 %v640
  %v745 = vpop.f32.mrb[0].mxu0
  %v746 = vadd.f32 %v662, %v745
  %v747 = vpop.f32.mrb[0].mxu0
  %v748 = vpop.f32.mrb[0].mxu0
  %v749 = vpop.f32.mrb[0].mxu0
  %750 = vdwg.mxu0
  %v751 = vmax.f32 %v746, 0.0
  %v752 = vld [vmem:[%s3] sm:$0xf]
  %v753 = vld [vmem:[%s3 + $0x4] sm:$0xf]
  %v754 = vld [vmem:[%s3 + $0x8] sm:$0xf]
  %v755 = vld [vmem:[%s4] sm:$0xff]
  %v756 = vld [vmem:[%s4 + $0x8] sm:$0xff]
  %v757 = vld [vmem:[%s4 + $0x10] sm:$0xff]
  %v758 = vpack.c.bf16 %v756, %v755
  %v759 = vpack.c.bf16 %v757, %v757
  %v763 = vunpack.c.l.b16 %v752
  %v764 = vunpack.c.l.b16 %v753
  %v765 = vunpack.c.l.b16 %v754
  %v766 = vpack.c.b16 %v764, %v763
  %v767 = vpack.c.b16 %v765, %v765
  %vm768 = vcmask 195584
  %v770 = vsel %vm768, %v766, 0
  %v773 = vsel %vm768, %v767, 0
  %v776 = vsel %vm145, %v759, 0
  %778 = vmatprep.subr.bf16.mxu0 0
  %779 = vmatpush1.bf16.msra.mxu0 %v758
  %780 = vmatprep.subr.bf16.mxu0 0
  %781 = vmatpush1.bf16.msra.mxu0 %v776
  %782 = vmatprep.subr.bf16.mxu0 0
  %783 = vmatpush1.bf16.msra.mxu0 0
  %784 = vmatprep.subr.bf16.mxu0 0
  %785 = vmatpush1.bf16.msra.mxu0 0
  %786 = vmatprep.subr.bf16.mxu0 0
  %787 = vmatpush1.bf16.msra.mxu0 0
  %788 = vmatprep.subr.bf16.mxu0 0
  %789 = vmatpush1.bf16.msra.mxu0 0
  %790 = vmatprep.subr.bf16.mxu0 0
  %791 = vmatpush1.bf16.msra.mxu0 0
  %792 = vmatprep.subr.bf16.mxu0 0
  %793 = vmatpush1.bf16.msra.mxu0 0
  %794 = vmatprep.subr.bf16.mxu0 0
  %795 = vmatpush1.bf16.msra.mxu0 0
  %796 = vmatprep.subr.bf16.mxu0 0
  %797 = vmatpush1.bf16.msra.mxu0 0
  %798 = vmatprep.subr.bf16.mxu0 0
  %799 = vmatpush1.bf16.msra.mxu0 0
  %800 = vmatprep.subr.bf16.mxu0 0
  %801 = vmatpush1.bf16.msra.mxu0 0
  %802 = vmatprep.subr.bf16.mxu0 0
  %803 = vmatpush1.bf16.msra.mxu0 0
  %804 = vmatprep.subr.bf16.mxu0 0
  %805 = vmatpush1.bf16.msra.mxu0 0
  %806 = vmatprep.subr.bf16.mxu0 0
  %807 = vmatpush1.bf16.msra.mxu0 0
  %808 = vmatprep.subr.bf16.mxu0 0
  %809 = vmatpush1.bf16.msra.mxu0 0
  %810 = vmatprep.mubr.bf16.mxu0 0
  %811 = vmatmul.mubr.bf16.gmra.mrb[0].mxu0 %v770
  %v812 = vpop.f32.mrb[0].mxu0
  %v813 = vadd.f32 0.0, %v812
  %v814 = vpop.f32.mrb[0].mxu0
  %v815 = vpop.f32.mrb[0].mxu0
  %v816 = vadd.f32 0.0, %v815
  %v817 = vpop.f32.mrb[0].mxu0
  %818 = vmatprep.mubr.bf16.mxu0 0
  %819 = vmatmul.mubr.bf16.gmra.mrb[0].mxu0 %v773
  %v820 = vpop.f32.mrb[0].mxu0
  %v821 = vadd.f32 0.0, %v820
  %v822 = vpop.f32.mrb[0].mxu0
  %v823 = vpop.f32.mrb[0].mxu0
  %v824 = vpop.f32.mrb[0].mxu0
  %825 = vdwg.mxu0
  %v826 = vadd.f32 %v755, %v813
  %v827 = vadd.f32 %v756, %v816
  %v828 = vadd.f32 %v757, %v821
  %v829 = vpack.c.bf16 %v827, %v826
  %v830 = vpack.c.bf16 %v828, %v828
  %v831 = vld [vmem:[%s8] sm:$0xf]
  %v832 = vld [vmem:[%s8 + $0x4] sm:$0xf]
  %v833 = vld [vmem:[%s11 + $0x3] sm:$0x1]
  %v834 = vlaneseq
  %v835 = vshrl.u32 %v834, 7
  %v836 = vsub.s32 0, %v835
  %v837 = vrot.slane %v833, %v836
  %v840 = vunpack.c.l.b16 %v831
  %v841 = vunpack.c.l.b16 %v832
  %v842 = vpack.c.b16 %v841, %v840
  %vm844 = vcmask 130048
  %v846 = vsel %vm844, %v829, 0
  %v849 = vsel %vm844, %v830, 0
  %851 = vmatprep.subr.bf16.mxu0 0
  %852 = vmatpush1.bf16.msra.mxu0 %v842
  %853 = vmatprep.subr.bf16.mxu0 0
  %854 = vmatpush1.bf16.msra.mxu0 0
  %855 = vmatprep.subr.bf16.mxu0 0
  %856 = vmatpush1.bf16.msra.mxu0 0
  %857 = vmatprep.subr.bf16.mxu0 0
  %858 = vmatpush1.bf16.msra.mxu0 0
  %859 = vmatprep.subr.bf16.mxu0 0
  %860 = vmatpush1.bf16.msra.mxu0 0
  %861 = vmatprep.subr.bf16.mxu0 0
  %862 = vmatpush1.bf16.msra.mxu0 0
  %863 = vmatprep.subr.bf16.mxu0 0
  %864 = vmatpush1.bf16.msra.mxu0 0
  %865 = vmatprep.subr.bf16.mxu0 0
  %866 = vmatpush1.bf16.msra.mxu0 0
  %867 = vmatprep.subr.bf16.mxu0 0
  %868 = vmatpush1.bf16.msra.mxu0 0
  %869 = vmatprep.subr.bf16.mxu0 0
  %870 = vmatpush1.bf16.msra.mxu0 0
  %871 = vmatprep.subr.bf16.mxu0 0
  %872 = vmatpush1.bf16.msra.mxu0 0
  %873 = vmatprep.subr.bf16.mxu0 0
  %874 = vmatpush1.bf16.msra.mxu0 0
  %875 = vmatprep.subr.bf16.mxu0 0
  %876 = vmatpush1.bf16.msra.mxu0 0
  %877 = vmatprep.subr.bf16.mxu0 0
  %878 = vmatpush1.bf16.msra.mxu0 0
  %879 = vmatprep.subr.bf16.mxu0 0
  %880 = vmatpush1.bf16.msra.mxu0 0
  %881 = vmatprep.subr.bf16.mxu0 0
  %882 = vmatpush1.bf16.msra.mxu0 0
  %883 = vmatprep.mubr.bf16.mxu0 0
  %884 = vmatmul.mubr.bf16.gmra.mrb[0].mxu0 %v846
  %v885 = vpop.f32.mrb[0].mxu0
  %v886 = vadd.f32 %v837, %v885
  %v887 = vpop.f32.mrb[0].mxu0
  %v888 = vpop.f32.mrb[0].mxu0
  %v889 = vadd.f32 %v837, %v888
  %v890 = vpop.f32.mrb[0].mxu0
  %891 = vmatprep.mubr.bf16.mxu0 0
  %892 = vmatmul.mubr.bf16.gmra.mrb[0].mxu0 %v849
  %v893 = vpop.f32.mrb[0].mxu0
  %v894 = vadd.f32 %v837, %v893
  %v895 = vpop.f32.mrb[0].mxu0
  %v896 = vpop.f32.mrb[0].mxu0
  %v897 = vpop.f32.mrb[0].mxu0
  %898 = vdwg.mxu0
  %v899 = vmax.f32 %v886, 0.0
  %v900 = vmax.f32 %v889, 0.0
  %v901 = vmax.f32 %v894, 0.0
  %v902 = vpack.c.bf16 %v900, %v899
  %v903 = vpack.c.bf16 %v901, %v901
  %s904 = scalar_lea.vmem %s9, 128
  %v905 = vld [vmem:[%s904] sm:$0xf]
  %v906 = vld [vmem:[%s904 + $0x4] sm:$0xf]
  %v907 = vld [vmem:[%s904 + $0x8] sm:$0xf]
  %v908 = vld [vmem:[%s904 + $0xc] sm:$0xf]
  %v909 = vld [vmem:[%s904 + $0x10] sm:$0xf]
  %v910 = vld [vmem:[%s904 + $0x14] sm:$0xf]
  %v911 = vld [vmem:[%s904 + $0x18] sm:$0xf]
  %v912 = vld [vmem:[%s904 + $0x1c] sm:$0xf]
  %v913 = vld [vmem:[%s904 + $0x20] sm:$0xf]
  %v914 = vld [vmem:[%s904 + $0x24] sm:$0xf]
  %v915 = vld [vmem:[%s904 + $0x28] sm:$0xf]
  %v916 = vld [vmem:[%s904 + $0x2c] sm:$0xf]
  %v917 = vld [vmem:[%s904 + $0x30] sm:$0xf]
  %v918 = vld [vmem:[%s904 + $0x34] sm:$0xf]
  %v919 = vld [vmem:[%s904 + $0x38] sm:$0xf]
  %v920 = vld [vmem:[%s904 + $0x3c] sm:$0xf]
  %v921 = vld [vmem:[%s11 + $0x4] sm:$0x1]
  %v922 = vlaneseq
  %v923 = vshrl.u32 %v922, 7
  %v924 = vsub.s32 0, %v923
  %v925 = vrot.slane %v921, %v924
  %v942 = vunpack.c.l.b16 %v905
  %v943 = vunpack.c.l.b16 %v906
  %v944 = vunpack.c.l.b16 %v907
  %v945 = vunpack.c.l.b16 %v908
  %v946 = vunpack.c.l.b16 %v909
  %v947 = vunpack.c.l.b16 %v910
  %v948 = vunpack.c.l.b16 %v911
  %v949 = vunpack.c.l.b16 %v912
  %v950 = vunpack.c.l.b16 %v913
  %v951 = vunpack.c.l.b16 %v914
  %v952 = vunpack.c.l.b16 %v915
  %v953 = vunpack.c.l.b16 %v916
  %v954 = vunpack.c.l.b16 %v917
  %v955 = vunpack.c.l.b16 %v918
  %v956 = vunpack.c.l.b16 %v919
  %v957 = vunpack.c.l.b16 %v920
  %v958 = vpack.c.b16 %v943, %v942
  %v959 = vpack.c.b16 %v945, %v944
  %v960 = vpack.c.b16 %v947, %v946
  %v961 = vpack.c.b16 %v949, %v948
  %v962 = vpack.c.b16 %v951, %v950
  %v963 = vpack.c.b16 %v953, %v952
  %v964 = vpack.c.b16 %v955, %v954
  %v965 = vpack.c.b16 %v957, %v956
  %974 = vmatprep.subr.bf16.mxu0 0
  %975 = vmatpush1.bf16.msra.mxu0 %v958
  %976 = vmatprep.subr.bf16.mxu0 0
  %977 = vmatpush1.bf16.msra.mxu0 %v959
  %978 = vmatprep.subr.bf16.mxu0 0
  %979 = vmatpush1.bf16.msra.mxu0 %v960
  %980 = vmatprep.subr.bf16.mxu0 0
  %981 = vmatpush1.bf16.msra.mxu0 %v961
  %982 = vmatprep.subr.bf16.mxu0 0
  %983 = vmatpush1.bf16.msra.mxu0 %v962
  %984 = vmatprep.subr.bf16.mxu0 0
  %985 = vmatpush1.bf16.msra.mxu0 %v963
  %986 = vmatprep.subr.bf16.mxu0 0
  %987 = vmatpush1.bf16.msra.mxu0 %v964
  %988 = vmatprep.subr.bf16.mxu0 0
  %989 = vmatpush1.bf16.msra.mxu0 %v965
  %990 = vmatprep.subr.bf16.mxu0 0
  %991 = vmatpush1.bf16.msra.mxu0 0
  %992 = vmatprep.subr.bf16.mxu0 0
  %993 = vmatpush1.bf16.msra.mxu0 0
  %994 = vmatprep.subr.bf16.mxu0 0
  %995 = vmatpush1.bf16.msra.mxu0 0
  %996 = vmatprep.subr.bf16.mxu0 0
  %997 = vmatpush1.bf16.msra.mxu0 0
  %998 = vmatprep.subr.bf16.mxu0 0
  %999 = vmatpush1.bf16.msra.mxu0 0
  %1000 = vmatprep.subr.bf16.mxu0 0
  %1001 = vmatpush1.bf16.msra.mxu0 0
  %1002 = vmatprep.subr.bf16.mxu0 0
  %1003 = vmatpush1.bf16.msra.mxu0 0
  %1004 = vmatprep.subr.bf16.mxu0 0
  %1005 = vmatpush1.bf16.msra.mxu0 0
  %1006 = vmatprep.mubr.bf16.mxu0 0
  %1007 = vmatmul.mubr.bf16.gmra.mrb[0].mxu0 %v902
  %v1008 = vpop.f32.mrb[0].mxu0
  %v1009 = vadd.f32 %v925, %v1008
  %v1010 = vpop.f32.mrb[0].mxu0
  %v1011 = vpop.f32.mrb[0].mxu0
  %v1012 = vadd.f32 %v925, %v1011
  %v1013 = vpop.f32.mrb[0].mxu0
  %1014 = vmatprep.mubr.bf16.mxu0 0
  %1015 = vmatmul.mubr.bf16.gmra.mrb[0].mxu0 %v903
  %v1016 = vpop.f32.mrb[0].mxu0
  %v1017 = vadd.f32 %v925, %v1016
  %v1018 = vpop.f32.mrb[0].mxu0
  %v1019 = vpop.f32.mrb[0].mxu0
  %v1020 = vpop.f32.mrb[0].mxu0
  %1021 = vdwg.mxu0
  %v1022 = vmax.f32 %v1009, 0.0
  %v1023 = vmax.f32 %v1012, 0.0
  %v1024 = vmax.f32 %v1017, 0.0
  %v1025 = vld [vmem:[%s11 + $0x5] sm:$0x1]
  %v1026 = vlaneseq
  %v1027 = vshrl.u32 %v1026, 7
  %v1028 = vsub.s32 0, %v1027
  %v1029 = vrot.slane %v1025, %v1028
  %v1030 = vmul.f32 %v1022, %v1029
  %v1031 = vmul.f32 %v1023, %v1029
  %v1032 = vmul.f32 %v1024, %v1029
  %v1033 = vld [vmem:[%s11 + $0x6] sm:$0x1]
  %v1034 = vlaneseq
  %v1035 = vshrl.u32 %v1034, 7
  %v1036 = vsub.s32 0, %v1035
  %v1037 = vrot.slane %v1033, %v1036
  %v1038 = vadd.f32 %v1030, %v1037
  %v1039 = vadd.f32 %v1031, %v1037
  %v1040 = vadd.f32 %v1032, %v1037
  %v1041 = vpack.c.bf16 %v1039, %v1038
  %v1042 = vpack.c.bf16 %v1040, %v1040
  %v1044 = vsel %vm145, %v1042, 0
  %1046 = vmatprep.subr.bf16.mxu0 0
  %1047 = vmatpush1.bf16.msra.mxu0 %v1041
  %1048 = vmatprep.subr.bf16.mxu0 0
  %1049 = vmatpush1.bf16.msra.mxu0 %v1044
  %1050 = vmatprep.subr.bf16.mxu0 0
  %1051 = vmatpush1.bf16.msra.mxu0 0
  %1052 = vmatprep.subr.bf16.mxu0 0
  %1053 = vmatpush1.bf16.msra.mxu0 0
  %1054 = vmatprep.subr.bf16.mxu0 0
  %1055 = vmatpush1.bf16.msra.mxu0 0
  %1056 = vmatprep.subr.bf16.mxu0 0
  %1057 = vmatpush1.bf16.msra.mxu0 0
  %1058 = vmatprep.subr.bf16.mxu0 0
  %1059 = vmatpush1.bf16.msra.mxu0 0
  %1060 = vmatprep.subr.bf16.mxu0 0
  %1061 = vmatpush1.bf16.msra.mxu0 0
  %1062 = vmatprep.subr.bf16.mxu0 0
  %1063 = vmatpush1.bf16.msra.mxu0 0
  %1064 = vmatprep.subr.bf16.mxu0 0
  %1065 = vmatpush1.bf16.msra.mxu0 0
  %1066 = vmatprep.subr.bf16.mxu0 0
  %1067 = vmatpush1.bf16.msra.mxu0 0
  %1068 = vmatprep.subr.bf16.mxu0 0
  %1069 = vmatpush1.bf16.msra.mxu0 0
  %1070 = vmatprep.subr.bf16.mxu0 0
  %1071 = vmatpush1.bf16.msra.mxu0 0
  %1072 = vmatprep.subr.bf16.mxu0 0
  %1073 = vmatpush1.bf16.msra.mxu0 0
  %1074 = vmatprep.subr.bf16.mxu0 0
  %1075 = vmatpush1.bf16.msra.mxu0 0
  %1076 = vmatprep.subr.bf16.mxu0 0
  %1077 = vmatpush1.bf16.msra.mxu0 0
  %1078 = vmatprep.mubr.bf16.mxu0 0
  %1079 = vmatmul.mubr.bf16.gmra.mrb[0].mxu0 %v770
  %v1080 = vpop.f32.mrb[0].mxu0
  %v1081 = vadd.f32 0.0, %v1080
  %v1082 = vpop.f32.mrb[0].mxu0
  %v1083 = vpop.f32.mrb[0].mxu0
  %v1084 = vadd.f32 0.0, %v1083
  %v1085 = vpop.f32.mrb[0].mxu0
  %1086 = vmatprep.mubr.bf16.mxu0 0
  %1087 = vmatmul.mubr.bf16.gmra.mrb[0].mxu0 %v773
  %v1088 = vpop.f32.mrb[0].mxu0
  %v1089 = vadd.f32 0.0, %v1088
  %v1090 = vpop.f32.mrb[0].mxu0
  %v1091 = vpop.f32.mrb[0].mxu0
  %v1092 = vpop.f32.mrb[0].mxu0
  %1093 = vdwg.mxu0
  %v1094 = vadd.f32 %v1038, %v1081
  %v1095 = vadd.f32 %v1039, %v1084
  %v1096 = vadd.f32 %v1040, %v1089
  %v1097 = vpack.c.bf16 %v1095, %v1094
  %v1098 = vpack.c.bf16 %v1096, %v1096
  %s1099 = scalar_lea.vmem %s9, 192
  %v1100 = vld [vmem:[%s1099] sm:$0xf]
  %v1101 = vld [vmem:[%s1099 + $0x4] sm:$0xf]
  %v1102 = vld [vmem:[%s1099 + $0x8] sm:$0xf]
  %v1103 = vld [vmem:[%s1099 + $0xc] sm:$0xf]
  %v1104 = vld [vmem:[%s1099 + $0x10] sm:$0xf]
  %v1105 = vld [vmem:[%s1099 + $0x14] sm:$0xf]
  %v1106 = vld [vmem:[%s1099 + $0x18] sm:$0xf]
  %v1107 = vld [vmem:[%s1099 + $0x1c] sm:$0xf]
  %v1108 = vld [vmem:[%s1099 + $0x20] sm:$0xf]
  %v1109 = vld [vmem:[%s1099 + $0x24] sm:$0xf]
  %v1110 = vld [vmem:[%s1099 + $0x28] sm:$0xf]
  %v1111 = vld [vmem:[%s1099 + $0x2c] sm:$0xf]
  %v1112 = vld [vmem:[%s1099 + $0x30] sm:$0xf]
  %v1113 = vld [vmem:[%s1099 + $0x34] sm:$0xf]
  %v1114 = vld [vmem:[%s1099 + $0x38] sm:$0xf]
  %v1115 = vld [vmem:[%s1099 + $0x3c] sm:$0xf]
  %v1116 = vld [vmem:[%s11 + $0x7] sm:$0x1]
  %v1117 = vlaneseq
  %v1118 = vshrl.u32 %v1117, 7
  %v1119 = vsub.s32 0, %v1118
  %v1120 = vrot.slane %v1116, %v1119
  %v1137 = vunpack.c.l.b16 %v1100
  %v1138 = vunpack.c.l.b16 %v1101
  %v1139 = vunpack.c.l.b16 %v1102
  %v1140 = vunpack.c.l.b16 %v1103
  %v1141 = vunpack.c.l.b16 %v1104
  %v1142 = vunpack.c.l.b16 %v1105
  %v1143 = vunpack.c.l.b16 %v1106
  %v1144 = vunpack.c.l.b16 %v1107
  %v1145 = vunpack.c.l.b16 %v1108
  %v1146 = vunpack.c.l.b16 %v1109
  %v1147 = vunpack.c.l.b16 %v1110
  %v1148 = vunpack.c.l.b16 %v1111
  %v1149 = vunpack.c.l.b16 %v1112
  %v1150 = vunpack.c.l.b16 %v1113
  %v1151 = vunpack.c.l.b16 %v1114
  %v1152 = vunpack.c.l.b16 %v1115
  %v1153 = vpack.c.b16 %v1138, %v1137
  %v1154 = vpack.c.b16 %v1140, %v1139
  %v1155 = vpack.c.b16 %v1142, %v1141
  %v1156 = vpack.c.b16 %v1144, %v1143
  %v1157 = vpack.c.b16 %v1146, %v1145
  %v1158 = vpack.c.b16 %v1148, %v1147
  %v1159 = vpack.c.b16 %v1150, %v1149
  %v1160 = vpack.c.b16 %v1152, %v1151
  %1169 = vmatprep.subr.bf16.mxu0 0
  %1170 = vmatpush1.bf16.msra.mxu0 %v1153
  %1171 = vmatprep.subr.bf16.mxu0 0
  %1172 = vmatpush1.bf16.msra.mxu0 %v1154
  %1173 = vmatprep.subr.bf16.mxu0 0
  %1174 = vmatpush1.bf16.msra.mxu0 %v1155
  %1175 = vmatprep.subr.bf16.mxu0 0
  %1176 = vmatpush1.bf16.msra.mxu0 %v1156
  %1177 = vmatprep.subr.bf16.mxu0 0
  %1178 = vmatpush1.bf16.msra.mxu0 %v1157
  %1179 = vmatprep.subr.bf16.mxu0 0
  %1180 = vmatpush1.bf16.msra.mxu0 %v1158
  %1181 = vmatprep.subr.bf16.mxu0 0
  %1182 = vmatpush1.bf16.msra.mxu0 %v1159
  %1183 = vmatprep.subr.bf16.mxu0 0
  %1184 = vmatpush1.bf16.msra.mxu0 %v1160
  %1185 = vmatprep.subr.bf16.mxu0 0
  %1186 = vmatpush1.bf16.msra.mxu0 0
  %1187 = vmatprep.subr.bf16.mxu0 0
  %1188 = vmatpush1.bf16.msra.mxu0 0
  %1189 = vmatprep.subr.bf16.mxu0 0
  %1190 = vmatpush1.bf16.msra.mxu0 0
  %1191 = vmatprep.subr.bf16.mxu0 0
  %1192 = vmatpush1.bf16.msra.mxu0 0
  %1193 = vmatprep.subr.bf16.mxu0 0
  %1194 = vmatpush1.bf16.msra.mxu0 0
  %1195 = vmatprep.subr.bf16.mxu0 0
  %1196 = vmatpush1.bf16.msra.mxu0 0
  %1197 = vmatprep.subr.bf16.mxu0 0
  %1198 = vmatpush1.bf16.msra.mxu0 0
  %1199 = vmatprep.subr.bf16.mxu0 0
  %1200 = vmatpush1.bf16.msra.mxu0 0
  %1201 = vmatprep.mubr.bf16.mxu0 0
  %1202 = vmatmul.mubr.bf16.gmra.mrb[0].mxu0 %v1097
  %v1203 = vpop.f32.mrb[0].mxu0
  %v1204 = vadd.f32 %v1120, %v1203
  %v1205 = vpop.f32.mrb[0].mxu0
  %v1206 = vpop.f32.mrb[0].mxu0
  %v1207 = vadd.f32 %v1120, %v1206
  %v1208 = vpop.f32.mrb[0].mxu0
  %1209 = vmatprep.mubr.bf16.mxu0 0
  %1210 = vmatmul.mubr.bf16.gmra.mrb[0].mxu0 %v1098
  %v1211 = vpop.f32.mrb[0].mxu0
  %v1212 = vadd.f32 %v1120, %v1211
  %v1213 = vpop.f32.mrb[0].mxu0
  %v1214 = vpop.f32.mrb[0].mxu0
  %v1215 = vpop.f32.mrb[0].mxu0
  %1216 = vdwg.mxu0
  %v1217 = vmax.f32 %v1204, 0.0
  %v1218 = vmax.f32 %v1207, 0.0
  %v1219 = vmax.f32 %v1212, 0.0
  %v1220 = vpack.c.bf16 %v1218, %v1217
  %v1221 = vpack.c.bf16 %v1219, %v1219
  %s1222 = scalar_lea.vmem %s9, 256
  %v1223 = vld [vmem:[%s1222] sm:$0xf]
  %v1224 = vld [vmem:[%s1222 + $0x4] sm:$0xf]
  %v1225 = vld [vmem:[%s1222 + $0x8] sm:$0xf]
  %v1226 = vld [vmem:[%s1222 + $0xc] sm:$0xf]
  %v1227 = vld [vmem:[%s1222 + $0x10] sm:$0xf]
  %v1228 = vld [vmem:[%s1222 + $0x14] sm:$0xf]
  %v1229 = vld [vmem:[%s1222 + $0x18] sm:$0xf]
  %v1230 = vld [vmem:[%s1222 + $0x1c] sm:$0xf]
  %v1231 = vld [vmem:[%s1222 + $0x20] sm:$0xf]
  %v1232 = vld [vmem:[%s1222 + $0x24] sm:$0xf]
  %v1233 = vld [vmem:[%s1222 + $0x28] sm:$0xf]
  %v1234 = vld [vmem:[%s1222 + $0x2c] sm:$0xf]
  %v1235 = vld [vmem:[%s1222 + $0x30] sm:$0xf]
  %v1236 = vld [vmem:[%s1222 + $0x34] sm:$0xf]
  %v1237 = vld [vmem:[%s1222 + $0x38] sm:$0xf]
  %v1238 = vld [vmem:[%s1222 + $0x3c] sm:$0xf]
  %v1239 = vld [vmem:[%s11 + $0x8] sm:$0x1]
  %v1240 = vlaneseq
  %v1241 = vshrl.u32 %v1240, 7
  %v1242 = vsub.s32 0, %v1241
  %v1243 = vrot.slane %v1239, %v1242
  %v1260 = vunpack.c.l.b16 %v1223
  %v1261 = vunpack.c.l.b16 %v1224
  %v1262 = vunpack.c.l.b16 %v1225
  %v1263 = vunpack.c.l.b16 %v1226
  %v1264 = vunpack.c.l.b16 %v1227
  %v1265 = vunpack.c.l.b16 %v1228
  %v1266 = vunpack.c.l.b16 %v1229
  %v1267 = vunpack.c.l.b16 %v1230
  %v1268 = vunpack.c.l.b16 %v1231
  %v1269 = vunpack.c.l.b16 %v1232
  %v1270 = vunpack.c.l.b16 %v1233
  %v1271 = vunpack.c.l.b16 %v1234
  %v1272 = vunpack.c.l.b16 %v1235
  %v1273 = vunpack.c.l.b16 %v1236
  %v1274 = vunpack.c.l.b16 %v1237
  %v1275 = vunpack.c.l.b16 %v1238
  %v1276 = vpack.c.b16 %v1261, %v1260
  %v1277 = vpack.c.b16 %v1263, %v1262
  %v1278 = vpack.c.b16 %v1265, %v1264
  %v1279 = vpack.c.b16 %v1267, %v1266
  %v1280 = vpack.c.b16 %v1269, %v1268
  %v1281 = vpack.c.b16 %v1271, %v1270
  %v1282 = vpack.c.b16 %v1273, %v1272
  %v1283 = vpack.c.b16 %v1275, %v1274
  %1292 = vmatprep.subr.bf16.mxu0 0
  %1293 = vmatpush1.bf16.msra.mxu0 %v1276
  %1294 = vmatprep.subr.bf16.mxu0 0
  %1295 = vmatpush1.bf16.msra.mxu0 %v1277
  %1296 = vmatprep.subr.bf16.mxu0 0
  %1297 = vmatpush1.bf16.msra.mxu0 %v1278
  %1298 = vmatprep.subr.bf16.mxu0 0
  %1299 = vmatpush1.bf16.msra.mxu0 %v1279
  %1300 = vmatprep.subr.bf16.mxu0 0
  %1301 = vmatpush1.bf16.msra.mxu0 %v1280
  %1302 = vmatprep.subr.bf16.mxu0 0
  %1303 = vmatpush1.bf16.msra.mxu0 %v1281
  %1304 = vmatprep.subr.bf16.mxu0 0
  %1305 = vmatpush1.bf16.msra.mxu0 %v1282
  %1306 = vmatprep.subr.bf16.mxu0 0
  %1307 = vmatpush1.bf16.msra.mxu0 %v1283
  %1308 = vmatprep.subr.bf16.mxu0 0
  %1309 = vmatpush1.bf16.msra.mxu0 0
  %1310 = vmatprep.subr.bf16.mxu0 0
  %1311 = vmatpush1.bf16.msra.mxu0 0
  %1312 = vmatprep.subr.bf16.mxu0 0
  %1313 = vmatpush1.bf16.msra.mxu0 0
  %1314 = vmatprep.subr.bf16.mxu0 0
  %1315 = vmatpush1.bf16.msra.mxu0 0
  %1316 = vmatprep.subr.bf16.mxu0 0
  %1317 = vmatpush1.bf16.msra.mxu0 0
  %1318 = vmatprep.subr.bf16.mxu0 0
  %1319 = vmatpush1.bf16.msra.mxu0 0
  %1320 = vmatprep.subr.bf16.mxu0 0
  %1321 = vmatpush1.bf16.msra.mxu0 0
  %1322 = vmatprep.subr.bf16.mxu0 0
  %1323 = vmatpush1.bf16.msra.mxu0 0
  %1324 = vmatprep.mubr.bf16.mxu0 0
  %1325 = vmatmul.mubr.bf16.gmra.mrb[0].mxu0 %v1220
  %v1326 = vpop.f32.mrb[0].mxu0
  %v1327 = vadd.f32 %v1243, %v1326
  %v1328 = vpop.f32.mrb[0].mxu0
  %v1329 = vpop.f32.mrb[0].mxu0
  %v1330 = vadd.f32 %v1243, %v1329
  %v1331 = vpop.f32.mrb[0].mxu0
  %1332 = vmatprep.mubr.bf16.mxu0 0
  %1333 = vmatmul.mubr.bf16.gmra.mrb[0].mxu0 %v1221
  %v1334 = vpop.f32.mrb[0].mxu0
  %v1335 = vadd.f32 %v1243, %v1334
  %v1336 = vpop.f32.mrb[0].mxu0
  %v1337 = vpop.f32.mrb[0].mxu0
  %v1338 = vpop.f32.mrb[0].mxu0
  %1339 = vdwg.mxu0
  %v1340 = vmax.f32 %v1327, 0.0
  %v1341 = vmax.f32 %v1330, 0.0
  %v1342 = vmax.f32 %v1335, 0.0
  %v1343 = vld [vmem:[%s11 + $0x9] sm:$0x1]
  %v1344 = vlaneseq
  %v1345 = vshrl.u32 %v1344, 7
  %v1346 = vsub.s32 0, %v1345
  %v1347 = vrot.slane %v1343, %v1346
  %v1348 = vmul.f32 %v1340, %v1347
  %v1349 = vmul.f32 %v1341, %v1347
  %v1350 = vmul.f32 %v1342, %v1347
  %v1351 = vld [vmem:[%s11 + $0xa] sm:$0x1]
  %v1352 = vlaneseq
  %v1353 = vshrl.u32 %v1352, 7
  %v1354 = vsub.s32 0, %v1353
  %v1355 = vrot.slane %v1351, %v1354
  %v1356 = vadd.f32 %v1348, %v1355
  %v1357 = vadd.f32 %v1349, %v1355
  %v1358 = vadd.f32 %v1350, %v1355
  %v1359 = vld [vmem:[%s5] sm:$0xff]
  %v1360 = vld [vmem:[%s5 + $0x8] sm:$0xff]
  %v1361 = vld [vmem:[%s5 + $0x10] sm:$0xff]
  %1363 = vset.pattern.permute.xlu0 0
  %1364 = vperm.xlu0 %1363, %v1359
  %v1365 = vpop.permute.xlu0 %1364
  %1368 = vset.pattern.permute.xlu0 0
  %1369 = vperm.xlu0 %1368, %v1360
  %v1370 = vpop.permute.xlu0 %1369
  %1373 = vset.pattern.permute.xlu0 0
  %1374 = vperm.xlu0 %1373, %v1361
  %v1375 = vpop.permute.xlu0 %1374
  %v1377 = vadd.f32 %v1356, %v1365
  %v1378 = vadd.f32 %v1357, %v1370
  %v1379 = vadd.f32 %v1358, %v1375
  %v1380 = vmax.f32 %v1377, %v1378
  %v1381 = vmax.f32 %v1380, %v1379
  %v1382 = vrot.slane %v1381, 4
  %v1383 = vmax.f32 %v1381, %v1382
  %v1384 = vrot.slane %v1383, 2
  %v1385 = vmax.f32 %v1383, %v1384
  %v1386 = vrot.slane %v1385, 1
  %v1387 = vmax.f32 %v1385, %v1386
  %1388 = vset.pattern.permute.xlu0 1
  %1389 = vperm.xlu0 %1388, %v1359
  %v1390 = vpop.permute.xlu0 %1389
  %1392 = vset.pattern.permute.xlu0 1
  %1393 = vperm.xlu0 %1392, %v1360
  %v1394 = vpop.permute.xlu0 %1393
  %1396 = vset.pattern.permute.xlu0 1
  %1397 = vperm.xlu0 %1396, %v1361
  %v1398 = vpop.permute.xlu0 %1397
  %v1400 = vadd.f32 %v1356, %v1390
  %v1401 = vadd.f32 %v1357, %v1394
  %v1402 = vadd.f32 %v1358, %v1398
  %v1403 = vmax.f32 %v1400, %v1401
  %v1404 = vmax.f32 %v1403, %v1402
  %v1405 = vrot.slane %v1404, 4
  %v1406 = vmax.f32 %v1404, %v1405
  %v1407 = vrot.slane %v1406, 2
  %v1408 = vmax.f32 %v1406, %v1407
  %v1409 = vrot.slane %v1408, 1
  %v1410 = vmax.f32 %v1408, %v1409
  %v1411 = vsel %vm516, %v1387, %v1410
  %v1412 = vsel %vm518, %v1411, 0.0
  %v1413 = vsel %vm520, %v1412, 0.0
  %v1414 = vsel %vm145, %v1413, 0.0
  %v1415 = vsel %vm523, %v1414, 0.0
  %v1416 = vsel %vm525, %v1415, 0.0
  %v1417 = vsel %vm527, %v1416, 0.0
  %v1418 = vpack.c.bf16 %v1417, %v1417
  %s1419 = scalar_lea.vmem %s9, 320
  %v1420 = vld [vmem:[%s1419] sm:$0xf]
  %v1421 = vld [vmem:[%s1419 + $0x4] sm:$0xf]
  %v1422 = vld [vmem:[%s1419 + $0x8] sm:$0xf]
  %v1423 = vld [vmem:[%s1419 + $0xc] sm:$0xf]
  %v1424 = vld [vmem:[%s1419 + $0x10] sm:$0xf]
  %v1425 = vld [vmem:[%s1419 + $0x14] sm:$0xf]
  %v1426 = vld [vmem:[%s1419 + $0x18] sm:$0xf]
  %v1427 = vld [vmem:[%s1419 + $0x1c] sm:$0xf]
  %v1428 = vld [vmem:[%s1419 + $0x20] sm:$0xf]
  %v1429 = vld [vmem:[%s1419 + $0x24] sm:$0xf]
  %v1430 = vld [vmem:[%s1419 + $0x28] sm:$0xf]
  %v1431 = vld [vmem:[%s1419 + $0x2c] sm:$0xf]
  %v1432 = vld [vmem:[%s1419 + $0x30] sm:$0xf]
  %v1433 = vld [vmem:[%s1419 + $0x34] sm:$0xf]
  %v1434 = vld [vmem:[%s1419 + $0x38] sm:$0xf]
  %v1435 = vld [vmem:[%s1419 + $0x3c] sm:$0xf]
  %v1436 = vld [vmem:[%s11 + $0xb] sm:$0x1]
  %v1437 = vlaneseq
  %v1438 = vshrl.u32 %v1437, 7
  %v1439 = vsub.s32 0, %v1438
  %v1440 = vrot.slane %v1436, %v1439
  %v1457 = vunpack.c.l.b16 %v1420
  %v1458 = vunpack.c.l.b16 %v1421
  %v1459 = vunpack.c.l.b16 %v1422
  %v1460 = vunpack.c.l.b16 %v1423
  %v1461 = vunpack.c.l.b16 %v1424
  %v1462 = vunpack.c.l.b16 %v1425
  %v1463 = vunpack.c.l.b16 %v1426
  %v1464 = vunpack.c.l.b16 %v1427
  %v1465 = vunpack.c.l.b16 %v1428
  %v1466 = vunpack.c.l.b16 %v1429
  %v1467 = vunpack.c.l.b16 %v1430
  %v1468 = vunpack.c.l.b16 %v1431
  %v1469 = vunpack.c.l.b16 %v1432
  %v1470 = vunpack.c.l.b16 %v1433
  %v1471 = vunpack.c.l.b16 %v1434
  %v1472 = vunpack.c.l.b16 %v1435
  %v1473 = vpack.c.b16 %v1458, %v1457
  %v1474 = vpack.c.b16 %v1460, %v1459
  %v1475 = vpack.c.b16 %v1462, %v1461
  %v1476 = vpack.c.b16 %v1464, %v1463
  %v1477 = vpack.c.b16 %v1466, %v1465
  %v1478 = vpack.c.b16 %v1468, %v1467
  %v1479 = vpack.c.b16 %v1470, %v1469
  %v1480 = vpack.c.b16 %v1472, %v1471
  %1489 = vmatprep.subr.bf16.mxu0 0
  %1490 = vmatpush1.bf16.msra.mxu0 %v1473
  %1491 = vmatprep.subr.bf16.mxu0 0
  %1492 = vmatpush1.bf16.msra.mxu0 %v1474
  %1493 = vmatprep.subr.bf16.mxu0 0
  %1494 = vmatpush1.bf16.msra.mxu0 %v1475
  %1495 = vmatprep.subr.bf16.mxu0 0
  %1496 = vmatpush1.bf16.msra.mxu0 %v1476
  %1497 = vmatprep.subr.bf16.mxu0 0
  %1498 = vmatpush1.bf16.msra.mxu0 %v1477
  %1499 = vmatprep.subr.bf16.mxu0 0
  %1500 = vmatpush1.bf16.msra.mxu0 %v1478
  %1501 = vmatprep.subr.bf16.mxu0 0
  %1502 = vmatpush1.bf16.msra.mxu0 %v1479
  %1503 = vmatprep.subr.bf16.mxu0 0
  %1504 = vmatpush1.bf16.msra.mxu0 %v1480
  %1505 = vmatprep.subr.bf16.mxu0 0
  %1506 = vmatpush1.bf16.msra.mxu0 0
  %1507 = vmatprep.subr.bf16.mxu0 0
  %1508 = vmatpush1.bf16.msra.mxu0 0
  %1509 = vmatprep.subr.bf16.mxu0 0
  %1510 = vmatpush1.bf16.msra.mxu0 0
  %1511 = vmatprep.subr.bf16.mxu0 0
  %1512 = vmatpush1.bf16.msra.mxu0 0
  %1513 = vmatprep.subr.bf16.mxu0 0
  %1514 = vmatpush1.bf16.msra.mxu0 0
  %1515 = vmatprep.subr.bf16.mxu0 0
  %1516 = vmatpush1.bf16.msra.mxu0 0
  %1517 = vmatprep.subr.bf16.mxu0 0
  %1518 = vmatpush1.bf16.msra.mxu0 0
  %1519 = vmatprep.subr.bf16.mxu0 0
  %1520 = vmatpush1.bf16.msra.mxu0 0
  %1521 = vmatprep.mubr.bf16.mxu0 0
  %1522 = vmatmul.mubr.bf16.gmra.mrb[0].mxu0 %v1418
  %v1523 = vpop.f32.mrb[0].mxu0
  %v1524 = vadd.f32 %v1440, %v1523
  %v1525 = vpop.f32.mrb[0].mxu0
  %v1526 = vpop.f32.mrb[0].mxu0
  %v1527 = vpop.f32.mrb[0].mxu0
  %1528 = vdwg.mxu0
  %v1529 = vmax.f32 %v1524, 0.0
  %v1530 = vpack.c.bf16 %v1529, %v1529
  %s1531 = scalar_lea.vmem %s9, 384
  %v1532 = vld [vmem:[%s1531] sm:$0xf]
  %v1533 = vld [vmem:[%s1531 + $0x4] sm:$0xf]
  %v1534 = vld [vmem:[%s1531 + $0x8] sm:$0xf]
  %v1535 = vld [vmem:[%s1531 + $0xc] sm:$0xf]
  %v1536 = vld [vmem:[%s1531 + $0x10] sm:$0xf]
  %v1537 = vld [vmem:[%s1531 + $0x14] sm:$0xf]
  %v1538 = vld [vmem:[%s1531 + $0x18] sm:$0xf]
  %v1539 = vld [vmem:[%s1531 + $0x1c] sm:$0xf]
  %v1540 = vld [vmem:[%s1531 + $0x20] sm:$0xf]
  %v1541 = vld [vmem:[%s1531 + $0x24] sm:$0xf]
  %v1542 = vld [vmem:[%s1531 + $0x28] sm:$0xf]
  %v1543 = vld [vmem:[%s1531 + $0x2c] sm:$0xf]
  %v1544 = vld [vmem:[%s1531 + $0x30] sm:$0xf]
  %v1545 = vld [vmem:[%s1531 + $0x34] sm:$0xf]
  %v1546 = vld [vmem:[%s1531 + $0x38] sm:$0xf]
  %v1547 = vld [vmem:[%s1531 + $0x3c] sm:$0xf]
  %v1548 = vld [vmem:[%s11 + $0xc] sm:$0x1]
  %v1549 = vlaneseq
  %v1550 = vshrl.u32 %v1549, 7
  %v1551 = vsub.s32 0, %v1550
  %v1552 = vrot.slane %v1548, %v1551
  %v1569 = vunpack.c.l.b16 %v1532
  %v1570 = vunpack.c.l.b16 %v1533
  %v1571 = vunpack.c.l.b16 %v1534
  %v1572 = vunpack.c.l.b16 %v1535
  %v1573 = vunpack.c.l.b16 %v1536
  %v1574 = vunpack.c.l.b16 %v1537
  %v1575 = vunpack.c.l.b16 %v1538
  %v1576 = vunpack.c.l.b16 %v1539
  %v1577 = vunpack.c.l.b16 %v1540
  %v1578 = vunpack.c.l.b16 %v1541
  %v1579 = vunpack.c.l.b16 %v1542
  %v1580 = vunpack.c.l.b16 %v1543
  %v1581 = vunpack.c.l.b16 %v1544
  %v1582 = vunpack.c.l.b16 %v1545
  %v1583 = vunpack.c.l.b16 %v1546
  %v1584 = vunpack.c.l.b16 %v1547
  %v1585 = vpack.c.b16 %v1570, %v1569
  %v1586 = vpack.c.b16 %v1572, %v1571
  %v1587 = vpack.c.b16 %v1574, %v1573
  %v1588 = vpack.c.b16 %v1576, %v1575
  %v1589 = vpack.c.b16 %v1578, %v1577
  %v1590 = vpack.c.b16 %v1580, %v1579
  %v1591 = vpack.c.b16 %v1582, %v1581
  %v1592 = vpack.c.b16 %v1584, %v1583
  %1601 = vmatprep.subr.bf16.mxu0 0
  %1602 = vmatpush1.bf16.msra.mxu0 %v1585
  %1603 = vmatprep.subr.bf16.mxu0 0
  %1604 = vmatpush1.bf16.msra.mxu0 %v1586
  %1605 = vmatprep.subr.bf16.mxu0 0
  %1606 = vmatpush1.bf16.msra.mxu0 %v1587
  %1607 = vmatprep.subr.bf16.mxu0 0
  %1608 = vmatpush1.bf16.msra.mxu0 %v1588
  %1609 = vmatprep.subr.bf16.mxu0 0
  %1610 = vmatpush1.bf16.msra.mxu0 %v1589
  %1611 = vmatprep.subr.bf16.mxu0 0
  %1612 = vmatpush1.bf16.msra.mxu0 %v1590
  %1613 = vmatprep.subr.bf16.mxu0 0
  %1614 = vmatpush1.bf16.msra.mxu0 %v1591
  %1615 = vmatprep.subr.bf16.mxu0 0
  %1616 = vmatpush1.bf16.msra.mxu0 %v1592
  %1617 = vmatprep.subr.bf16.mxu0 0
  %1618 = vmatpush1.bf16.msra.mxu0 0
  %1619 = vmatprep.subr.bf16.mxu0 0
  %1620 = vmatpush1.bf16.msra.mxu0 0
  %1621 = vmatprep.subr.bf16.mxu0 0
  %1622 = vmatpush1.bf16.msra.mxu0 0
  %1623 = vmatprep.subr.bf16.mxu0 0
  %1624 = vmatpush1.bf16.msra.mxu0 0
  %1625 = vmatprep.subr.bf16.mxu0 0
  %1626 = vmatpush1.bf16.msra.mxu0 0
  %1627 = vmatprep.subr.bf16.mxu0 0
  %1628 = vmatpush1.bf16.msra.mxu0 0
  %1629 = vmatprep.subr.bf16.mxu0 0
  %1630 = vmatpush1.bf16.msra.mxu0 0
  %1631 = vmatprep.subr.bf16.mxu0 0
  %1632 = vmatpush1.bf16.msra.mxu0 0
  %1633 = vmatprep.mubr.bf16.mxu0 0
  %1634 = vmatmul.mubr.bf16.gmra.mrb[0].mxu0 %v1530
  %v1635 = vpop.f32.mrb[0].mxu0
  %v1636 = vadd.f32 %v1552, %v1635
  %v1637 = vpop.f32.mrb[0].mxu0
  %v1638 = vpop.f32.mrb[0].mxu0
  %v1639 = vpop.f32.mrb[0].mxu0
  %1640 = vdwg.mxu0
  %v1641 = vmax.f32 %v1636, 0.0
  %v1642 = vpack.c.bf16 %v751, %v751
  %v1643 = vpack.c.bf16 %v1641, %v1641
  %s1644 = scalar_lea.vmem %s10, 128
  %v1645 = vld [vmem:[%s1644] sm:$0xf]
  %v1646 = vld [vmem:[%s1644 + $0x4] sm:$0xf]
  %v1647 = vld [vmem:[%s1644 + $0x8] sm:$0xf]
  %v1648 = vld [vmem:[%s1644 + $0xc] sm:$0xf]
  %v1649 = vld [vmem:[%s1644 + $0x10] sm:$0xf]
  %v1650 = vld [vmem:[%s1644 + $0x14] sm:$0xf]
  %v1651 = vld [vmem:[%s1644 + $0x18] sm:$0xf]
  %v1652 = vld [vmem:[%s1644 + $0x1c] sm:$0xf]
  %v1653 = vld [vmem:[%s1644 + $0x20] sm:$0xf]
  %v1654 = vld [vmem:[%s1644 + $0x24] sm:$0xf]
  %v1655 = vld [vmem:[%s1644 + $0x28] sm:$0xf]
  %v1656 = vld [vmem:[%s1644 + $0x2c] sm:$0xf]
  %v1657 = vld [vmem:[%s1644 + $0x30] sm:$0xf]
  %v1658 = vld [vmem:[%s1644 + $0x34] sm:$0xf]
  %v1659 = vld [vmem:[%s1644 + $0x38] sm:$0xf]
  %v1660 = vld [vmem:[%s1644 + $0x3c] sm:$0xf]
  %v1661 = vld [vmem:[%s1644 + $0x40] sm:$0xf]
  %v1662 = vld [vmem:[%s1644 + $0x44] sm:$0xf]
  %v1663 = vld [vmem:[%s1644 + $0x48] sm:$0xf]
  %v1664 = vld [vmem:[%s1644 + $0x4c] sm:$0xf]
  %v1665 = vld [vmem:[%s1644 + $0x50] sm:$0xf]
  %v1666 = vld [vmem:[%s1644 + $0x54] sm:$0xf]
  %v1667 = vld [vmem:[%s1644 + $0x58] sm:$0xf]
  %v1668 = vld [vmem:[%s1644 + $0x5c] sm:$0xf]
  %v1669 = vld [vmem:[%s1644 + $0x60] sm:$0xf]
  %v1670 = vld [vmem:[%s1644 + $0x64] sm:$0xf]
  %v1671 = vld [vmem:[%s1644 + $0x68] sm:$0xf]
  %v1672 = vld [vmem:[%s1644 + $0x6c] sm:$0xf]
  %v1673 = vld [vmem:[%s1644 + $0x70] sm:$0xf]
  %v1674 = vld [vmem:[%s1644 + $0x74] sm:$0xf]
  %v1675 = vld [vmem:[%s1644 + $0x78] sm:$0xf]
  %v1676 = vld [vmem:[%s1644 + $0x7c] sm:$0xf]
  %v1677 = vld [vmem:[%s11 + $0xd] sm:$0x1]
  %v1678 = vlaneseq
  %v1679 = vshrl.u32 %v1678, 7
  %v1680 = vsub.s32 0, %v1679
  %v1681 = vrot.slane %v1677, %v1680
  %v1714 = vunpack.c.l.b16 %v1645
  %v1715 = vunpack.c.l.b16 %v1646
  %v1716 = vunpack.c.l.b16 %v1647
  %v1717 = vunpack.c.l.b16 %v1648
  %v1718 = vunpack.c.l.b16 %v1649
  %v1719 = vunpack.c.l.b16 %v1650
  %v1720 = vunpack.c.l.b16 %v1651
  %v1721 = vunpack.c.l.b16 %v1652
  %v1722 = vunpack.c.l.b16 %v1653
  %v1723 = vunpack.c.l.b16 %v1654
  %v1724 = vunpack.c.l.b16 %v1655
  %v1725 = vunpack.c.l.b16 %v1656
  %v1726 = vunpack.c.l.b16 %v1657
  %v1727 = vunpack.c.l.b16 %v1658
  %v1728 = vunpack.c.l.b16 %v1659
  %v1729 = vunpack.c.l.b16 %v1660
  %v1730 = vunpack.c.l.b16 %v1661
  %v1731 = vunpack.c.l.b16 %v1662
  %v1732 = vunpack.c.l.b16 %v1663
  %v1733 = vunpack.c.l.b16 %v1664
  %v1734 = vunpack.c.l.b16 %v1665
  %v1735 = vunpack.c.l.b16 %v1666
  %v1736 = vunpack.c.l.b16 %v1667
  %v1737 = vunpack.c.l.b16 %v1668
  %v1738 = vunpack.c.l.b16 %v1669
  %v1739 = vunpack.c.l.b16 %v1670
  %v1740 = vunpack.c.l.b16 %v1671
  %v1741 = vunpack.c.l.b16 %v1672
  %v1742 = vunpack.c.l.b16 %v1673
  %v1743 = vunpack.c.l.b16 %v1674
  %v1744 = vunpack.c.l.b16 %v1675
  %v1745 = vunpack.c.l.b16 %v1676
  %v1746 = vpack.c.b16 %v1715, %v1714
  %v1747 = vpack.c.b16 %v1717, %v1716
  %v1748 = vpack.c.b16 %v1719, %v1718
  %v1749 = vpack.c.b16 %v1721, %v1720
  %v1750 = vpack.c.b16 %v1723, %v1722
  %v1751 = vpack.c.b16 %v1725, %v1724
  %v1752 = vpack.c.b16 %v1727, %v1726
  %v1753 = vpack.c.b16 %v1729, %v1728
  %v1754 = vpack.c.b16 %v1731, %v1730
  %v1755 = vpack.c.b16 %v1733, %v1732
  %v1756 = vpack.c.b16 %v1735, %v1734
  %v1757 = vpack.c.b16 %v1737, %v1736
  %v1758 = vpack.c.b16 %v1739, %v1738
  %v1759 = vpack.c.b16 %v1741, %v1740
  %v1760 = vpack.c.b16 %v1743, %v1742
  %v1761 = vpack.c.b16 %v1745, %v1744
  %1778 = vmatprep.subr.bf16.mxu0 0
  %1779 = vmatpush1.bf16.msra.mxu0 %v1746
  %1780 = vmatprep.subr.bf16.mxu0 0
  %1781 = vmatpush1.bf16.msra.mxu0 %v1747
  %1782 = vmatprep.subr.bf16.mxu0 0
  %1783 = vmatpush1.bf16.msra.mxu0 %v1748
  %1784 = vmatprep.subr.bf16.mxu0 0
  %1785 = vmatpush1.bf16.msra.mxu0 %v1749
  %1786 = vmatprep.subr.bf16.mxu0 0
  %1787 = vmatpush1.bf16.msra.mxu0 %v1750
  %1788 = vmatprep.subr.bf16.mxu0 0
  %1789 = vmatpush1.bf16.msra.mxu0 %v1751
  %1790 = vmatprep.subr.bf16.mxu0 0
  %1791 = vmatpush1.bf16.msra.mxu0 %v1752
  %1792 = vmatprep.subr.bf16.mxu0 0
  %1793 = vmatpush1.bf16.msra.mxu0 %v1753
  %1794 = vmatprep.subr.bf16.mxu0 0
  %1795 = vmatpush1.bf16.msra.mxu0 %v1754
  %1796 = vmatprep.subr.bf16.mxu0 0
  %1797 = vmatpush1.bf16.msra.mxu0 %v1755
  %1798 = vmatprep.subr.bf16.mxu0 0
  %1799 = vmatpush1.bf16.msra.mxu0 %v1756
  %1800 = vmatprep.subr.bf16.mxu0 0
  %1801 = vmatpush1.bf16.msra.mxu0 %v1757
  %1802 = vmatprep.subr.bf16.mxu0 0
  %1803 = vmatpush1.bf16.msra.mxu0 %v1758
  %1804 = vmatprep.subr.bf16.mxu0 0
  %1805 = vmatpush1.bf16.msra.mxu0 %v1759
  %1806 = vmatprep.subr.bf16.mxu0 0
  %1807 = vmatpush1.bf16.msra.mxu0 %v1760
  %1808 = vmatprep.subr.bf16.mxu0 0
  %1809 = vmatpush1.bf16.msra.mxu0 %v1761
  %1810 = vmatprep.mubr.bf16.mxu0 %v1643
  %1811 = vmatmul.mubr.bf16.gmra.mrb[0].mxu0 %v1642
  %v1812 = vpop.f32.mrb[0].mxu0
  %v1813 = vadd.f32 %v1681, %v1812
  %v1814 = vpop.f32.mrb[0].mxu0
  %v1815 = vpop.f32.mrb[0].mxu0
  %v1816 = vpop.f32.mrb[0].mxu0
  %1817 = vdwg.mxu0
  %vm1818 = vcmp.gt.f32.partialorder %v1813, 0.0
  %v1819 = vmin.f32 %v1813, 0.0
  %v1820 = vmul.f32 %v1819, 1.442695
  %v1821 = vpow.pop %v1820
  %v1822 = vsub.f32 %v1821, 1.0
  %v1823 = vsel %vm1818, %v1813, %v1822
  %v1824 = vpack.c.bf16 %v1823, %v1823
  %s1825 = scalar_lea.vmem %s9, 448
  %v1826 = vld [vmem:[%s1825] sm:$0xf]
  %v1827 = vld [vmem:[%s1825 + $0x4] sm:$0xf]
  %v1828 = vld [vmem:[%s1825 + $0x8] sm:$0xf]
  %v1829 = vld [vmem:[%s1825 + $0xc] sm:$0xf]
  %v1830 = vld [vmem:[%s1825 + $0x10] sm:$0xf]
  %v1831 = vld [vmem:[%s1825 + $0x14] sm:$0xf]
  %v1832 = vld [vmem:[%s1825 + $0x18] sm:$0xf]
  %v1833 = vld [vmem:[%s1825 + $0x1c] sm:$0xf]
  %v1834 = vld [vmem:[%s1825 + $0x20] sm:$0xf]
  %v1835 = vld [vmem:[%s1825 + $0x24] sm:$0xf]
  %v1836 = vld [vmem:[%s1825 + $0x28] sm:$0xf]
  %v1837 = vld [vmem:[%s1825 + $0x2c] sm:$0xf]
  %v1838 = vld [vmem:[%s1825 + $0x30] sm:$0xf]
  %v1839 = vld [vmem:[%s1825 + $0x34] sm:$0xf]
  %v1840 = vld [vmem:[%s1825 + $0x38] sm:$0xf]
  %v1841 = vld [vmem:[%s1825 + $0x3c] sm:$0xf]
  %v1842 = vld [vmem:[%s11 + $0xe] sm:$0x1]
  %v1843 = vlaneseq
  %v1844 = vshrl.u32 %v1843, 7
  %v1845 = vsub.s32 0, %v1844
  %v1846 = vrot.slane %v1842, %v1845
  %v1863 = vunpack.c.l.b16 %v1826
  %v1864 = vunpack.c.l.b16 %v1827
  %v1865 = vunpack.c.l.b16 %v1828
  %v1866 = vunpack.c.l.b16 %v1829
  %v1867 = vunpack.c.l.b16 %v1830
  %v1868 = vunpack.c.l.b16 %v1831
  %v1869 = vunpack.c.l.b16 %v1832
  %v1870 = vunpack.c.l.b16 %v1833
  %v1871 = vunpack.c.l.b16 %v1834
  %v1872 = vunpack.c.l.b16 %v1835
  %v1873 = vunpack.c.l.b16 %v1836
  %v1874 = vunpack.c.l.b16 %v1837
  %v1875 = vunpack.c.l.b16 %v1838
  %v1876 = vunpack.c.l.b16 %v1839
  %v1877 = vunpack.c.l.b16 %v1840
  %v1878 = vunpack.c.l.b16 %v1841
  %v1879 = vpack.c.b16 %v1864, %v1863
  %v1880 = vpack.c.b16 %v1866, %v1865
  %v1881 = vpack.c.b16 %v1868, %v1867
  %v1882 = vpack.c.b16 %v1870, %v1869
  %v1883 = vpack.c.b16 %v1872, %v1871
  %v1884 = vpack.c.b16 %v1874, %v1873
  %v1885 = vpack.c.b16 %v1876, %v1875
  %v1886 = vpack.c.b16 %v1878, %v1877
  %1895 = vmatprep.subr.bf16.mxu0 0
  %1896 = vmatpush1.bf16.msra.mxu0 %v1879
  %1897 = vmatprep.subr.bf16.mxu0 0
  %1898 = vmatpush1.bf16.msra.mxu0 %v1880
  %1899 = vmatprep.subr.bf16.mxu0 0
  %1900 = vmatpush1.bf16.msra.mxu0 %v1881
  %1901 = vmatprep.subr.bf16.mxu0 0
  %1902 = vmatpush1.bf16.msra.mxu0 %v1882
  %1903 = vmatprep.subr.bf16.mxu0 0
  %1904 = vmatpush1.bf16.msra.mxu0 %v1883
  %1905 = vmatprep.subr.bf16.mxu0 0
  %1906 = vmatpush1.bf16.msra.mxu0 %v1884
  %1907 = vmatprep.subr.bf16.mxu0 0
  %1908 = vmatpush1.bf16.msra.mxu0 %v1885
  %1909 = vmatprep.subr.bf16.mxu0 0
  %1910 = vmatpush1.bf16.msra.mxu0 %v1886
  %1911 = vmatprep.subr.bf16.mxu0 0
  %1912 = vmatpush1.bf16.msra.mxu0 0
  %1913 = vmatprep.subr.bf16.mxu0 0
  %1914 = vmatpush1.bf16.msra.mxu0 0
  %1915 = vmatprep.subr.bf16.mxu0 0
  %1916 = vmatpush1.bf16.msra.mxu0 0
  %1917 = vmatprep.subr.bf16.mxu0 0
  %1918 = vmatpush1.bf16.msra.mxu0 0
  %1919 = vmatprep.subr.bf16.mxu0 0
  %1920 = vmatpush1.bf16.msra.mxu0 0
  %1921 = vmatprep.subr.bf16.mxu0 0
  %1922 = vmatpush1.bf16.msra.mxu0 0
  %1923 = vmatprep.subr.bf16.mxu0 0
  %1924 = vmatpush1.bf16.msra.mxu0 0
  %1925 = vmatprep.subr.bf16.mxu0 0
  %1926 = vmatpush1.bf16.msra.mxu0 0
  %1927 = vmatprep.mubr.bf16.mxu0 0
  %1928 = vmatmul.mubr.bf16.gmra.mrb[0].mxu0 %v1824
  %v1929 = vpop.f32.mrb[0].mxu0
  %v1930 = vadd.f32 %v1846, %v1929
  %v1931 = vpop.f32.mrb[0].mxu0
  %v1932 = vpop.f32.mrb[0].mxu0
  %v1933 = vpop.f32.mrb[0].mxu0
  %1934 = vdwg.mxu0
  %vm1935 = vcmp.gt.f32.partialorder %v1930, 0.0
  %v1936 = vmin.f32 %v1930, 0.0
  %v1937 = vmul.f32 %v1936, 1.442695
  %v1938 = vpow.pop %v1937
  %v1939 = vsub.f32 %v1938, 1.0
  %v1940 = vsel %vm1935, %v1930, %v1939
  %v1941 = vpack.c.bf16 %v1940, %v1940
  %s1942 = scalar_lea.vmem %s9, 512
  %v1943 = vld [vmem:[%s1942] sm:$0xf]
  %v1944 = vld [vmem:[%s1942 + $0x4] sm:$0xf]
  %v1945 = vld [vmem:[%s1942 + $0x8] sm:$0xf]
  %v1946 = vld [vmem:[%s1942 + $0xc] sm:$0xf]
  %v1947 = vld [vmem:[%s1942 + $0x10] sm:$0xf]
  %v1948 = vld [vmem:[%s1942 + $0x14] sm:$0xf]
  %v1949 = vld [vmem:[%s1942 + $0x18] sm:$0xf]
  %v1950 = vld [vmem:[%s1942 + $0x1c] sm:$0xf]
  %v1951 = vld [vmem:[%s1942 + $0x20] sm:$0xf]
  %v1952 = vld [vmem:[%s1942 + $0x24] sm:$0xf]
  %v1953 = vld [vmem:[%s1942 + $0x28] sm:$0xf]
  %v1954 = vld [vmem:[%s1942 + $0x2c] sm:$0xf]
  %v1955 = vld [vmem:[%s1942 + $0x30] sm:$0xf]
  %v1956 = vld [vmem:[%s1942 + $0x34] sm:$0xf]
  %v1957 = vld [vmem:[%s1942 + $0x38] sm:$0xf]
  %v1958 = vld [vmem:[%s1942 + $0x3c] sm:$0xf]
  %v1959 = vld [vmem:[%s11 + $0xf] sm:$0x1]
  %v1960 = vlaneseq
  %v1961 = vshrl.u32 %v1960, 7
  %v1962 = vsub.s32 0, %v1961
  %v1963 = vrot.slane %v1959, %v1962
  %v1980 = vunpack.c.l.b16 %v1943
  %v1981 = vunpack.c.l.b16 %v1944
  %v1982 = vunpack.c.l.b16 %v1945
  %v1983 = vunpack.c.l.b16 %v1946
  %v1984 = vunpack.c.l.b16 %v1947
  %v1985 = vunpack.c.l.b16 %v1948
  %v1986 = vunpack.c.l.b16 %v1949
  %v1987 = vunpack.c.l.b16 %v1950
  %v1988 = vunpack.c.l.b16 %v1951
  %v1989 = vunpack.c.l.b16 %v1952
  %v1990 = vunpack.c.l.b16 %v1953
  %v1991 = vunpack.c.l.b16 %v1954
  %v1992 = vunpack.c.l.b16 %v1955
  %v1993 = vunpack.c.l.b16 %v1956
  %v1994 = vunpack.c.l.b16 %v1957
  %v1995 = vunpack.c.l.b16 %v1958
  %v1996 = vpack.c.b16 %v1981, %v1980
  %v1997 = vpack.c.b16 %v1983, %v1982
  %v1998 = vpack.c.b16 %v1985, %v1984
  %v1999 = vpack.c.b16 %v1987, %v1986
  %v2000 = vpack.c.b16 %v1989, %v1988
  %v2001 = vpack.c.b16 %v1991, %v1990
  %v2002 = vpack.c.b16 %v1993, %v1992
  %v2003 = vpack.c.b16 %v1995, %v1994
  %2012 = vmatprep.subr.bf16.mxu0 0
  %2013 = vmatpush1.bf16.msra.mxu0 %v1996
  %2014 = vmatprep.subr.bf16.mxu0 0
  %2015 = vmatpush1.bf16.msra.mxu0 %v1997
  %2016 = vmatprep.subr.bf16.mxu0 0
  %2017 = vmatpush1.bf16.msra.mxu0 %v1998
  %2018 = vmatprep.subr.bf16.mxu0 0
  %2019 = vmatpush1.bf16.msra.mxu0 %v1999
  %2020 = vmatprep.subr.bf16.mxu0 0
  %2021 = vmatpush1.bf16.msra.mxu0 %v2000
  %2022 = vmatprep.subr.bf16.mxu0 0
  %2023 = vmatpush1.bf16.msra.mxu0 %v2001
  %2024 = vmatprep.subr.bf16.mxu0 0
  %2025 = vmatpush1.bf16.msra.mxu0 %v2002
  %2026 = vmatprep.subr.bf16.mxu0 0
  %2027 = vmatpush1.bf16.msra.mxu0 %v2003
  %2028 = vmatprep.subr.bf16.mxu0 0
  %2029 = vmatpush1.bf16.msra.mxu0 0
  %2030 = vmatprep.subr.bf16.mxu0 0
  %2031 = vmatpush1.bf16.msra.mxu0 0
  %2032 = vmatprep.subr.bf16.mxu0 0
  %2033 = vmatpush1.bf16.msra.mxu0 0
  %2034 = vmatprep.subr.bf16.mxu0 0
  %2035 = vmatpush1.bf16.msra.mxu0 0
  %2036 = vmatprep.subr.bf16.mxu0 0
  %2037 = vmatpush1.bf16.msra.mxu0 0
  %2038 = vmatprep.subr.bf16.mxu0 0
  %2039 = vmatpush1.bf16.msra.mxu0 0
  %2040 = vmatprep.subr.bf16.mxu0 0
  %2041 = vmatpush1.bf16.msra.mxu0 0
  %2042 = vmatprep.subr.bf16.mxu0 0
  %2043 = vmatpush1.bf16.msra.mxu0 0
  %2044 = vmatprep.mubr.bf16.mxu0 0
  %2045 = vmatmul.mubr.bf16.gmra.mrb[0].mxu0 %v1941
  %v2046 = vpop.f32.mrb[0].mxu0
  %v2047 = vadd.f32 %v1963, %v2046
  %v2048 = vpop.f32.mrb[0].mxu0
  %v2049 = vpop.f32.mrb[0].mxu0
  %v2050 = vpop.f32.mrb[0].mxu0
  %2051 = vdwg.mxu0
  %2052 = vst [vmem:[%s12] sm:$0xff] %v2047
  // Predicated region
  $region50: #{graph_graph_forward.1} parent=0 // pred_check
    _
  $region51: #{graph_graph_forward.1} parent=0 // pred_check_branch
    %2054 = sbr.rel (0) target = $region53
  $region52: #{graph_graph_forward.1} parent=0 // pred_region
    _
  $region53: #{graph_graph_forward.1} parent=0 // pred_fallthru
    _
  // Predicated region
  $region54: #{graph_graph_forward.1} parent=0 // pred_check
    _
  $region55: #{graph_graph_forward.1} parent=0 // pred_check_branch
    %2056 = sbr.rel (0) target = $region57
  $region56: #{graph_graph_forward.1} parent=0 // pred_region
    _
  $region57: #{graph_graph_forward.1} parent=0 // pred_fallthru
    _

</llo_original>
